<compile_context>
chip_gen: v7x
topology: tpu7x:2x2x1
jax: 0.10.0
libtpu: 0.0.40
codegen_flags: <defaults>
</compile_context>

<pallas_src>
import jax
import jax.numpy as jnp
from jax.experimental import pallas as pl
from jax.experimental.pallas import tpu as pltpu


# ---------------------------------------------------------------------------
# Kernel 1: fused conv (as matmul, transposed/lane-dense) + bias + ReLU +
#           2x2 max-pool, for one tile of the M = B*PH*PW axis.
# ---------------------------------------------------------------------------
def _conv_relu_pool_kernel(cols_ref, w_ref, b_ref, o_ref):
    # cols_ref: (4, K, TM) bf16   axis0 = position inside the 2x2 pool window,
    #                             K = kh*kw*Cin, TM tile of (b, pooled_y, pooled_x)
    # w_ref:    (Cout, K)   bf16
    # b_ref:    (Cout, 1)   f32
    # o_ref:    (Cout, TM)  bf16  (lane-dense: last dim is flattened spatial*batch)
    w = w_ref[...]
    z0 = jnp.dot(w, cols_ref[0], preferred_element_type=jnp.float32)
    z1 = jnp.dot(w, cols_ref[1], preferred_element_type=jnp.float32)
    z2 = jnp.dot(w, cols_ref[2], preferred_element_type=jnp.float32)
    z3 = jnp.dot(w, cols_ref[3], preferred_element_type=jnp.float32)
    # 2x2 max-pool == max over the 4 window positions; bias is shared and ReLU
    # is monotone, so bias+ReLU can be applied once after the max.
    z = jnp.maximum(jnp.maximum(z0, z1), jnp.maximum(z2, z3))
    z = jnp.maximum(z + b_ref[...], 0.0)
    o_ref[...] = z.astype(o_ref.dtype)


def conv_relu_pool(cols4, w_t, b_col, *, tile_m=256):
    """cols4: (4, K, M) bf16, w_t: (Cout, K) bf16, b_col: (Cout, 1) f32
       -> (Cout, M) bf16 with M = B*PH*PW."""
    Q, K, M = cols4.shape
    Cout = w_t.shape[0]
    tm = M if M <= tile_m else tile_m
    return pl.pallas_call(
        _conv_relu_pool_kernel,
        out_shape=jax.ShapeDtypeStruct((Cout, M), jnp.bfloat16),
        grid=(pl.cdiv(M, tm),),
        in_specs=[
            pl.BlockSpec((Q, K, tm), lambda m: (0, 0, m)),
            pl.BlockSpec((Cout, K), lambda m: (0, 0)),
            pl.BlockSpec((Cout, 1), lambda m: (0, 0)),
        ],
        out_specs=pl.BlockSpec((Cout, tm), lambda m: (0, m)),
        compiler_params=pltpu.CompilerParams(
            dimension_semantics=("parallel",)),  # shards M-tiles over v7x's 2 TCs
    )(cols4, w_t, b_col)


# ---------------------------------------------------------------------------
# Kernel 2: fc1 + ReLU -> fc2 + ReLU -> fc3, all in one kernel.
# ---------------------------------------------------------------------------
def _fc_fused_kernel(x_ref, w1_ref, b1_ref, w2_ref, b2_ref, w3_ref, b3_ref,
                     o_ref):
    h = jnp.dot(x_ref[...], w1_ref[...], preferred_element_type=jnp.float32)
    h = jnp.maximum(h + b1_ref[...], 0.0).astype(w2_ref.dtype)
    h = jnp.dot(h, w2_ref[...], preferred_element_type=jnp.float32)
    h = jnp.maximum(h + b2_ref[...], 0.0).astype(w3_ref.dtype)
    y = jnp.dot(h, w3_ref[...], preferred_element_type=jnp.float32)
    o_ref[...] = (y + b3_ref[...]).astype(o_ref.dtype)


def fc_fused(x, w1, b1, w2, b2, w3, b3):
    B = x.shape[0]
    N = w3.shape[1]

    def full(shape):
        return pl.BlockSpec(shape, lambda i, _s=len(shape): (0,) * _s)

    return pl.pallas_call(
        _fc_fused_kernel,
        out_shape=jax.ShapeDtypeStruct((B, N), jnp.float32),
        grid=(1,),
        in_specs=[full(x.shape), full(w1.shape), full(b1.shape),
                  full(w2.shape), full(b2.shape), full(w3.shape),
                  full(b3.shape)],
        out_specs=full((B, N)),
    )(x, w1, b1, w2, b2, w3, b3)


# ---------------------------------------------------------------------------
# Glue: pool-aware im2col (pure data movement) and stage wrapper.
# ---------------------------------------------------------------------------
def _build_pool_cols(x_nchw, kh, kw):
    """Returns cols4 of shape (4, K, M) with
       cols4[qy*2+qx, (i*kw+j)*Cin+ci, b*PH*PW+py*PW+px]
         = x[b, ci, 2*py + qy + i, 2*px + qx + j]."""
    B, Cin, H, W = x_nchw.shape
    OH, OW = H - kh + 1, W - kw + 1
    PH, PW = OH // 2, OW // 2
    per_q = []
    for qy in (0, 1):
        for qx in (0, 1):
            feats = []
            for i in range(kh):
                for j in range(kw):
                    ys, xs = qy + i, qx + j
                    sl = x_nchw[:, :, ys:ys + 2 * PH - 1:2,
                                xs:xs + 2 * PW - 1:2]       # (B, Cin, PH, PW)
                    feats.append(sl)
            f = jnp.stack(feats, axis=0)                    # (kh*kw, B, Cin, PH, PW)
            f = f.transpose(0, 2, 1, 3, 4)                  # (kh*kw, Cin, B, PH, PW)
            per_q.append(f.reshape(kh * kw * Cin, B * PH * PW))
    return jnp.stack(per_q, axis=0)                         # (4, K, M)


def conv_relu_pool_stage(x_nchw, w_t, b_col, *, kh, kw):
    B, Cin, H, W = x_nchw.shape
    PH, PW = (H - kh + 1) // 2, (W - kw + 1) // 2
    Cout = w_t.shape[0]
    cols4 = _build_pool_cols(x_nchw, kh, kw)
    y = conv_relu_pool(cols4, w_t, b_col)                   # (Cout, B*PH*PW)
    return y.reshape(Cout, B, PH, PW).transpose(1, 0, 2, 3)  # back to NCHW


# ---------------------------------------------------------------------------
# Parameters: PyTorch-layout init + one-time conversion to kernel layouts.
# ---------------------------------------------------------------------------
def init_params(key):
    ks = jax.random.split(key, 10)

    def u(k, shape, fan_in):
        bound = 1.0 / (fan_in ** 0.5)
        return jax.random.uniform(k, shape, jnp.float32, -bound, bound)

    return {
        "conv1_w": u(ks[0], (6, 3, 5, 5), 3 * 5 * 5),    # (Cout, Cin, KH, KW)
        "conv1_b": u(ks[1], (6,), 3 * 5 * 5),
        "conv2_w": u(ks[2], (16, 6, 5, 5), 6 * 5 * 5),
        "conv2_b": u(ks[3], (16,), 6 * 5 * 5),
        "fc1_w": u(ks[4], (120, 16 * 5 * 5), 16 * 5 * 5),  # (Dout, Din)
        "fc1_b": u(ks[5], (120,), 16 * 5 * 5),
        "fc2_w": u(ks[6], (84, 120), 120),
        "fc2_b": u(ks[7], (84,), 120),
        "fc3_w": u(ks[8], (10, 84), 84),
        "fc3_b": u(ks[9], (10,), 84),
    }


def prepare_params(p):
    """One-time (outside jit) conversion: conv weights -> (Cout, kh*kw*Cin)
    bf16 in (i, j, ci) feature order, fc weights -> (Din, Dout) bf16,
    biases -> f32 columns/rows."""
    def conv_w(w):                                  # (Cout, Cin, KH, KW)
        co, ci, kh, kw = w.shape
        return (jnp.asarray(w).transpose(0, 2, 3, 1)
                .reshape(co, kh * kw * ci).astype(jnp.bfloat16))

    return {
        "c1w": conv_w(p["conv1_w"]),
        "c1b": jnp.asarray(p["conv1_b"], jnp.float32).reshape(-1, 1),
        "c2w": conv_w(p["conv2_w"]),
        "c2b": jnp.asarray(p["conv2_b"], jnp.float32).reshape(-1, 1),
        "f1w": jnp.asarray(p["fc1_w"]).T.astype(jnp.bfloat16),
        "f1b": jnp.asarray(p["fc1_b"], jnp.float32).reshape(1, -1),
        "f2w": jnp.asarray(p["fc2_w"]).T.astype(jnp.bfloat16),
        "f2b": jnp.asarray(p["fc2_b"], jnp.float32).reshape(1, -1),
        "f3w": jnp.asarray(p["fc3_w"]).T.astype(jnp.bfloat16),
        "f3b": jnp.asarray(p["fc3_b"], jnp.float32).reshape(1, -1),
    }


# ---------------------------------------------------------------------------
# Forward pass (3 Pallas kernels total) and a pure-f32 JAX reference.
# ---------------------------------------------------------------------------
@jax.jit
def net_forward(x_nchw, kp):
    x = x_nchw.astype(jnp.bfloat16)                                   # bf16 MXU inputs
    x = conv_relu_pool_stage(x, kp["c1w"], kp["c1b"], kh=5, kw=5)     # (B, 6, 14, 14)
    x = conv_relu_pool_stage(x, kp["c2w"], kp["c2b"], kh=5, kw=5)     # (B, 16, 5, 5)
    x = x.reshape(x.shape[0], -1)                                     # PyTorch (C,H,W) flatten
    return fc_fused(x, kp["f1w"], kp["f1b"], kp["f2w"], kp["f2b"],
                    kp["f3w"], kp["f3b"])                             # (B, 10) f32


def reference_forward(x_nchw, p):
    def conv(x, w, b):
        y = jax.lax.conv_general_dilated(
            x, w, (1, 1), "VALID", dimension_numbers=("NCHW", "OIHW", "NCHW"))
        return jax.nn.relu(y + b[None, :, None, None])

    def pool(x):
        return jax.lax.reduce_window(x, -jnp.inf, jax.lax.max,
                                     (1, 1, 2, 2), (1, 1, 2, 2), "VALID")

    x = pool(conv(x_nchw, p["conv1_w"], p["conv1_b"]))
    x = pool(conv(x, p["conv2_w"], p["conv2_b"]))
    x = x.reshape(x.shape[0], -1)
    x = jax.nn.relu(x @ p["fc1_w"].T + p["fc1_b"])
    x = jax.nn.relu(x @ p["fc2_w"].T + p["fc2_b"])
    return x @ p["fc3_w"].T + p["fc3_b"]


if __name__ == "__main__":
    key = jax.random.PRNGKey(0)
    pkey, xkey = jax.random.split(key)
    params = init_params(pkey)
    kparams = prepare_params(params)          # layout prep hoisted out of jit

    # fc1 expects 16*5*5 features, which fixes the spatial size at 32x32.
    x = jax.random.normal(xkey, (2, 3, 32, 32), jnp.float32)

    out = jax.block_until_ready(net_forward(x, kparams))
    assert out.shape == (2, 10) and out.dtype == jnp.float32

    ref = jax.block_until_ready(reference_forward(x, params))
    max_err = float(jnp.max(jnp.abs(out - ref)))
    assert jnp.allclose(out, ref, atol=3e-2, rtol=3e-2), (
        f"mismatch vs JAX reference (max abs err {max_err:.4f})")

    print("KERNEL_OK")
</pallas_src>

<mosaic_0001>
module attributes {stable_mosaic.version = 11 : i64} {
  func.func @_conv_relu_pool_kernel(%arg0: i32, %arg1: memref<4x75x256xbf16, #tpu.memory_space<vmem>>, %arg2: memref<6x75xbf16, #tpu.memory_space<vmem>>, %arg3: memref<6x1xf32, #tpu.memory_space<vmem>>, %arg4: memref<6x256xbf16, #tpu.memory_space<vmem>>) attributes {dimension_semantics = [#tpu.dimension_semantics<parallel>], iteration_bounds = array<i64: 2>, scalar_prefetch = 0 : i64, scratch_operands = 0 : i64, tpu.core_type = #tpu.core_type<tc>, window_params = [{transform_indices = @transform_0, window_bounds = array<i64: 4, 75, 256>}, {pipeline_mode = #tpu.pipeline_mode<synchronous>, transform_indices = @transform_1, window_bounds = array<i64: 6, 75>}, {pipeline_mode = #tpu.pipeline_mode<synchronous>, transform_indices = @transform_2, window_bounds = array<i64: 6, 1>}, {transform_indices = @transform_3, window_bounds = array<i64: 6, 256>}]} {
    %c0 = arith.constant 0 : index
    %c0_0 = arith.constant 0 : index
    %0 = vector.load %arg2[%c0, %c0_0] : memref<6x75xbf16, #tpu.memory_space<vmem>>, vector<6x75xbf16>
    %c0_1 = arith.constant 0 : index
    %c0_2 = arith.constant 0 : index
    %c0_3 = arith.constant 0 : index
    %1 = vector.load %arg1[%c0_1, %c0_2, %c0_3] : memref<4x75x256xbf16, #tpu.memory_space<vmem>>, vector<1x75x256xbf16>
    %2 = vector.shape_cast %1 : vector<1x75x256xbf16> to vector<75x256xbf16>
    %cst = arith.constant dense<0.000000e+00> : vector<6x256xf32>
    %3 = tpu.matmul %0, %2, %cst {dimension_numbers = #tpu.dot_dimension_numbers<[1], [0], [0], [1], [0, 0, 1, 1], [], []>} : vector<6x75xbf16>, vector<75x256xbf16>, vector<6x256xf32> -> vector<6x256xf32>
    %c1 = arith.constant 1 : index
    %c0_4 = arith.constant 0 : index
    %c0_5 = arith.constant 0 : index
    %4 = vector.load %arg1[%c1, %c0_4, %c0_5] : memref<4x75x256xbf16, #tpu.memory_space<vmem>>, vector<1x75x256xbf16>
    %5 = vector.shape_cast %4 : vector<1x75x256xbf16> to vector<75x256xbf16>
    %cst_6 = arith.constant dense<0.000000e+00> : vector<6x256xf32>
    %6 = tpu.matmul %0, %5, %cst_6 {dimension_numbers = #tpu.dot_dimension_numbers<[1], [0], [0], [1], [0, 0, 1, 1], [], []>} : vector<6x75xbf16>, vector<75x256xbf16>, vector<6x256xf32> -> vector<6x256xf32>
    %c2 = arith.constant 2 : index
    %c0_7 = arith.constant 0 : index
    %c0_8 = arith.constant 0 : index
    %7 = vector.load %arg1[%c2, %c0_7, %c0_8] : memref<4x75x256xbf16, #tpu.memory_space<vmem>>, vector<1x75x256xbf16>
    %8 = vector.shape_cast %7 : vector<1x75x256xbf16> to vector<75x256xbf16>
    %cst_9 = arith.constant dense<0.000000e+00> : vector<6x256xf32>
    %9 = tpu.matmul %0, %8, %cst_9 {dimension_numbers = #tpu.dot_dimension_numbers<[1], [0], [0], [1], [0, 0, 1, 1], [], []>} : vector<6x75xbf16>, vector<75x256xbf16>, vector<6x256xf32> -> vector<6x256xf32>
    %c3 = arith.constant 3 : index
    %c0_10 = arith.constant 0 : index
    %c0_11 = arith.constant 0 : index
    %10 = vector.load %arg1[%c3, %c0_10, %c0_11] : memref<4x75x256xbf16, #tpu.memory_space<vmem>>, vector<1x75x256xbf16>
    %11 = vector.shape_cast %10 : vector<1x75x256xbf16> to vector<75x256xbf16>
    %cst_12 = arith.constant dense<0.000000e+00> : vector<6x256xf32>
    %12 = tpu.matmul %0, %11, %cst_12 {dimension_numbers = #tpu.dot_dimension_numbers<[1], [0], [0], [1], [0, 0, 1, 1], [], []>} : vector<6x75xbf16>, vector<75x256xbf16>, vector<6x256xf32> -> vector<6x256xf32>
    %13 = arith.maximumf %3, %6 : vector<6x256xf32>
    %14 = arith.maximumf %9, %12 : vector<6x256xf32>
    %15 = arith.maximumf %13, %14 : vector<6x256xf32>
    %c0_13 = arith.constant 0 : index
    %c0_14 = arith.constant 0 : index
    %16 = vector.load %arg3[%c0_13, %c0_14] : memref<6x1xf32, #tpu.memory_space<vmem>>, vector<6x1xf32>
    %17 = vector.broadcast %16 : vector<6x1xf32> to vector<6x256xf32>
    %18 = arith.addf %15, %17 : vector<6x256xf32>
    %cst_15 = arith.constant 0.000000e+00 : f32
    %19 = vector.broadcast %cst_15 : f32 to vector<6x256xf32>
    %20 = arith.maximumf %18, %19 : vector<6x256xf32>
    %21 = arith.truncf %20 : vector<6x256xf32> to vector<6x256xbf16>
    %c0_16 = arith.constant 0 : index
    %c0_17 = arith.constant 0 : index
    %22 = vector.load %arg4[%c0_16, %c0_17] : memref<6x256xbf16, #tpu.memory_space<vmem>>, vector<6x256xbf16>
    tpu.vector_store %arg4[%c0_16, %c0_17], %21 {strides = array<i32>} : memref<6x256xbf16, #tpu.memory_space<vmem>>, vector<6x256xbf16>,
    return
  }
  func.func @transform_0(%arg0: i32) -> (i32, i32, i32) {
    %c0_i32 = arith.constant 0 : i32
    %c0_i32_0 = arith.constant 0 : i32
    %c0_i32_1 = arith.constant 0 : i32
    return %c0_i32, %c0_i32_0, %arg0 : i32, i32, i32
  }
  func.func @transform_1(%arg0: i32) -> (i32, i32) {
    %c0_i32 = arith.constant 0 : i32
    %c0_i32_0 = arith.constant 0 : i32
    %c0_i32_1 = arith.constant 0 : i32
    return %c0_i32, %c0_i32_0 : i32, i32
  }
  func.func @transform_2(%arg0: i32) -> (i32, i32) {
    %c0_i32 = arith.constant 0 : i32
    %c0_i32_0 = arith.constant 0 : i32
    %c0_i32_1 = arith.constant 0 : i32
    return %c0_i32, %c0_i32_0 : i32, i32
  }
  func.func @transform_3(%arg0: i32) -> (i32, i32) {
    %c0_i32 = arith.constant 0 : i32
    %c0_i32_0 = arith.constant 0 : i32
    return %c0_i32, %arg0 : i32, i32
  }
}

module attributes {stable_mosaic.version = 11 : i64} {
  func.func @_conv_relu_pool_kernel(%arg0: i32, %arg1: memref<4x150x50xbf16, #tpu.memory_space<vmem>>, %arg2: memref<16x150xbf16, #tpu.memory_space<vmem>>, %arg3: memref<16x1xf32, #tpu.memory_space<vmem>>, %arg4: memref<16x50xbf16, #tpu.memory_space<vmem>>) attributes {dimension_semantics = [#tpu.dimension_semantics<parallel>], iteration_bounds = array<i64: 1>, scalar_prefetch = 0 : i64, scratch_operands = 0 : i64, tpu.core_type = #tpu.core_type<tc>, window_params = [{transform_indices = @transform_0, window_bounds = array<i64: 4, 150, 50>}, {pipeline_mode = #tpu.pipeline_mode<synchronous>, transform_indices = @transform_1, window_bounds = array<i64: 16, 150>}, {pipeline_mode = #tpu.pipeline_mode<synchronous>, transform_indices = @transform_2, window_bounds = array<i64: 16, 1>}, {transform_indices = @transform_3, window_bounds = array<i64: 16, 50>}]} {
    %c0 = arith.constant 0 : index
    %c0_0 = arith.constant 0 : index
    %0 = vector.load %arg2[%c0, %c0_0] : memref<16x150xbf16, #tpu.memory_space<vmem>>, vector<16x150xbf16>
    %c0_1 = arith.constant 0 : index
    %c0_2 = arith.constant 0 : index
    %c0_3 = arith.constant 0 : index
    %1 = vector.load %arg1[%c0_1, %c0_2, %c0_3] : memref<4x150x50xbf16, #tpu.memory_space<vmem>>, vector<1x150x50xbf16>
    %2 = vector.shape_cast %1 : vector<1x150x50xbf16> to vector<150x50xbf16>
    %cst = arith.constant dense<0.000000e+00> : vector<16x50xf32>
    %3 = tpu.matmul %0, %2, %cst {dimension_numbers = #tpu.dot_dimension_numbers<[1], [0], [0], [1], [0, 0, 1, 1], [], []>} : vector<16x150xbf16>, vector<150x50xbf16>, vector<16x50xf32> -> vector<16x50xf32>
    %c1 = arith.constant 1 : index
    %c0_4 = arith.constant 0 : index
    %c0_5 = arith.constant 0 : index
    %4 = vector.load %arg1[%c1, %c0_4, %c0_5] : memref<4x150x50xbf16, #tpu.memory_space<vmem>>, vector<1x150x50xbf16>
    %5 = vector.shape_cast %4 : vector<1x150x50xbf16> to vector<150x50xbf16>
    %cst_6 = arith.constant dense<0.000000e+00> : vector<16x50xf32>
    %6 = tpu.matmul %0, %5, %cst_6 {dimension_numbers = #tpu.dot_dimension_numbers<[1], [0], [0], [1], [0, 0, 1, 1], [], []>} : vector<16x150xbf16>, vector<150x50xbf16>, vector<16x50xf32> -> vector<16x50xf32>
    %c2 = arith.constant 2 : index
    %c0_7 = arith.constant 0 : index
    %c0_8 = arith.constant 0 : index
    %7 = vector.load %arg1[%c2, %c0_7, %c0_8] : memref<4x150x50xbf16, #tpu.memory_space<vmem>>, vector<1x150x50xbf16>
    %8 = vector.shape_cast %7 : vector<1x150x50xbf16> to vector<150x50xbf16>
    %cst_9 = arith.constant dense<0.000000e+00> : vector<16x50xf32>
    %9 = tpu.matmul %0, %8, %cst_9 {dimension_numbers = #tpu.dot_dimension_numbers<[1], [0], [0], [1], [0, 0, 1, 1], [], []>} : vector<16x150xbf16>, vector<150x50xbf16>, vector<16x50xf32> -> vector<16x50xf32>
    %c3 = arith.constant 3 : index
    %c0_10 = arith.constant 0 : index
    %c0_11 = arith.constant 0 : index
    %10 = vector.load %arg1[%c3, %c0_10, %c0_11] : memref<4x150x50xbf16, #tpu.memory_space<vmem>>, vector<1x150x50xbf16>
    %11 = vector.shape_cast %10 : vector<1x150x50xbf16> to vector<150x50xbf16>
    %cst_12 = arith.constant dense<0.000000e+00> : vector<16x50xf32>
    %12 = tpu.matmul %0, %11, %cst_12 {dimension_numbers = #tpu.dot_dimension_numbers<[1], [0], [0], [1], [0, 0, 1, 1], [], []>} : vector<16x150xbf16>, vector<150x50xbf16>, vector<16x50xf32> -> vector<16x50xf32>
    %13 = arith.maximumf %3, %6 : vector<16x50xf32>
    %14 = arith.maximumf %9, %12 : vector<16x50xf32>
    %15 = arith.maximumf %13, %14 : vector<16x50xf32>
    %c0_13 = arith.constant 0 : index
    %c0_14 = arith.constant 0 : index
    %16 = vector.load %arg3[%c0_13, %c0_14] : memref<16x1xf32, #tpu.memory_space<vmem>>, vector<16x1xf32>
    %17 = vector.broadcast %16 : vector<16x1xf32> to vector<16x50xf32>
    %18 = arith.addf %15, %17 : vector<16x50xf32>
    %cst_15 = arith.constant 0.000000e+00 : f32
    %19 = vector.broadcast %cst_15 : f32 to vector<16x50xf32>
    %20 = arith.maximumf %18, %19 : vector<16x50xf32>
    %21 = arith.truncf %20 : vector<16x50xf32> to vector<16x50xbf16>
    %c0_16 = arith.constant 0 : index
    %c0_17 = arith.constant 0 : index
    %22 = vector.load %arg4[%c0_16, %c0_17] : memref<16x50xbf16, #tpu.memory_space<vmem>>, vector<16x50xbf16>
    tpu.vector_store %arg4[%c0_16, %c0_17], %21 {strides = array<i32>} : memref<16x50xbf16, #tpu.memory_space<vmem>>, vector<16x50xbf16>,
    return
  }
  func.func @transform_0(%arg0: i32) -> (i32, i32, i32) {
    %c0_i32 = arith.constant 0 : i32
    %c0_i32_0 = arith.constant 0 : i32
    %c0_i32_1 = arith.constant 0 : i32
    return %c0_i32, %c0_i32_0, %arg0 : i32, i32, i32
  }
  func.func @transform_1(%arg0: i32) -> (i32, i32) {
    %c0_i32 = arith.constant 0 : i32
    %c0_i32_0 = arith.constant 0 : i32
    %c0_i32_1 = arith.constant 0 : i32
    return %c0_i32, %c0_i32_0 : i32, i32
  }
  func.func @transform_2(%arg0: i32) -> (i32, i32) {
    %c0_i32 = arith.constant 0 : i32
    %c0_i32_0 = arith.constant 0 : i32
    %c0_i32_1 = arith.constant 0 : i32
    return %c0_i32, %c0_i32_0 : i32, i32
  }
  func.func @transform_3(%arg0: i32) -> (i32, i32) {
    %c0_i32 = arith.constant 0 : i32
    %c0_i32_0 = arith.constant 0 : i32
    return %c0_i32, %arg0 : i32, i32
  }
}

module attributes {stable_mosaic.version = 11 : i64} {
  func.func @_fc_fused_kernel(%arg0: i32, %arg1: memref<2x400xbf16, #tpu.memory_space<vmem>>, %arg2: memref<400x120xbf16, #tpu.memory_space<vmem>>, %arg3: memref<1x120xf32, #tpu.memory_space<vmem>>, %arg4: memref<120x84xbf16, #tpu.memory_space<vmem>>, %arg5: memref<1x84xf32, #tpu.memory_space<vmem>>, %arg6: memref<84x10xbf16, #tpu.memory_space<vmem>>, %arg7: memref<1x10xf32, #tpu.memory_space<vmem>>, %arg8: memref<2x10xf32, #tpu.memory_space<vmem>>) attributes {dimension_semantics = [#tpu.dimension_semantics<arbitrary>], iteration_bounds = array<i64: 1>, scalar_prefetch = 0 : i64, scratch_operands = 0 : i64, tpu.core_type = #tpu.core_type<tc>, window_params = [{pipeline_mode = #tpu.pipeline_mode<synchronous>, transform_indices = @transform_0, window_bounds = array<i64: 2, 400>}, {pipeline_mode = #tpu.pipeline_mode<synchronous>, transform_indices = @transform_1, window_bounds = array<i64: 400, 120>}, {pipeline_mode = #tpu.pipeline_mode<synchronous>, transform_indices = @transform_2, window_bounds = array<i64: 1, 120>}, {pipeline_mode = #tpu.pipeline_mode<synchronous>, transform_indices = @transform_3, window_bounds = array<i64: 120, 84>}, {pipeline_mode = #tpu.pipeline_mode<synchronous>, transform_indices = @transform_4, window_bounds = array<i64: 1, 84>}, {pipeline_mode = #tpu.pipeline_mode<synchronous>, transform_indices = @transform_5, window_bounds = array<i64: 84, 10>}, {pipeline_mode = #tpu.pipeline_mode<synchronous>, transform_indices = @transform_6, window_bounds = array<i64: 1, 10>}, {pipeline_mode = #tpu.pipeline_mode<synchronous>, transform_indices = @transform_7, window_bounds = array<i64: 2, 10>}]} {
    %c0 = arith.constant 0 : index
    %c0_0 = arith.constant 0 : index
    %0 = vector.load %arg1[%c0, %c0_0] : memref<2x400xbf16, #tpu.memory_space<vmem>>, vector<2x400xbf16>
    %c0_1 = arith.constant 0 : index
    %c0_2 = arith.constant 0 : index
    %1 = vector.load %arg2[%c0_1, %c0_2] : memref<400x120xbf16, #tpu.memory_space<vmem>>, vector<400x120xbf16>
    %cst = arith.constant dense<0.000000e+00> : vector<2x120xf32>
    %2 = tpu.matmul %0, %1, %cst {dimension_numbers = #tpu.dot_dimension_numbers<[1], [0], [0], [1], [0, 0, 1, 1], [], []>} : vector<2x400xbf16>, vector<400x120xbf16>, vector<2x120xf32> -> vector<2x120xf32>
    %c0_3 = arith.constant 0 : index
    %c0_4 = arith.constant 0 : index
    %3 = vector.load %arg3[%c0_3, %c0_4] : memref<1x120xf32, #tpu.memory_space<vmem>>, vector<1x120xf32>
    %4 = vector.broadcast %3 : vector<1x120xf32> to vector<2x120xf32>
    %5 = arith.addf %2, %4 : vector<2x120xf32>
    %cst_5 = arith.constant 0.000000e+00 : f32
    %6 = vector.broadcast %cst_5 : f32 to vector<2x120xf32>
    %7 = arith.maximumf %5, %6 : vector<2x120xf32>
    %8 = arith.truncf %7 : vector<2x120xf32> to vector<2x120xbf16>
    %c0_6 = arith.constant 0 : index
    %c0_7 = arith.constant 0 : index
    %9 = vector.load %arg4[%c0_6, %c0_7] : memref<120x84xbf16, #tpu.memory_space<vmem>>, vector<120x84xbf16>
    %cst_8 = arith.constant dense<0.000000e+00> : vector<2x84xf32>
    %10 = tpu.matmul %8, %9, %cst_8 {dimension_numbers = #tpu.dot_dimension_numbers<[1], [0], [0], [1], [0, 0, 1, 1], [], []>} : vector<2x120xbf16>, vector<120x84xbf16>, vector<2x84xf32> -> vector<2x84xf32>
    %c0_9 = arith.constant 0 : index
    %c0_10 = arith.constant 0 : index
    %11 = vector.load %arg5[%c0_9, %c0_10] : memref<1x84xf32, #tpu.memory_space<vmem>>, vector<1x84xf32>
    %12 = vector.broadcast %11 : vector<1x84xf32> to vector<2x84xf32>
    %13 = arith.addf %10, %12 : vector<2x84xf32>
    %cst_11 = arith.constant 0.000000e+00 : f32
    %14 = vector.broadcast %cst_11 : f32 to vector<2x84xf32>
    %15 = arith.maximumf %13, %14 : vector<2x84xf32>
    %16 = arith.truncf %15 : vector<2x84xf32> to vector<2x84xbf16>
    %c0_12 = arith.constant 0 : index
    %c0_13 = arith.constant 0 : index
    %17 = vector.load %arg6[%c0_12, %c0_13] : memref<84x10xbf16, #tpu.memory_space<vmem>>, vector<84x10xbf16>
    %cst_14 = arith.constant dense<0.000000e+00> : vector<2x10xf32>
    %18 = tpu.matmul %16, %17, %cst_14 {dimension_numbers = #tpu.dot_dimension_numbers<[1], [0], [0], [1], [0, 0, 1, 1], [], []>} : vector<2x84xbf16>, vector<84x10xbf16>, vector<2x10xf32> -> vector<2x10xf32>
    %c0_15 = arith.constant 0 : index
    %c0_16 = arith.constant 0 : index
    %19 = vector.load %arg7[%c0_15, %c0_16] : memref<1x10xf32, #tpu.memory_space<vmem>>, vector<1x10xf32>
    %20 = vector.broadcast %19 : vector<1x10xf32> to vector<2x10xf32>
    %21 = arith.addf %18, %20 : vector<2x10xf32>
    %c0_17 = arith.constant 0 : index
    %c0_18 = arith.constant 0 : index
    %22 = vector.load %arg8[%c0_17, %c0_18] : memref<2x10xf32, #tpu.memory_space<vmem>>, vector<2x10xf32>
    tpu.vector_store %arg8[%c0_17, %c0_18], %21 {strides = array<i32>} : memref<2x10xf32, #tpu.memory_space<vmem>>, vector<2x10xf32>,
    return
  }
  func.func @transform_0(%arg0: i32) -> (i32, i32) {
    %c0_i32 = arith.constant 0 : i32
    %c0_i32_0 = arith.constant 0 : i32
    %c0_i32_1 = arith.constant 0 : i32
    return %c0_i32, %c0_i32_0 : i32, i32
  }
  func.func @transform_1(%arg0: i32) -> (i32, i32) {
    %c0_i32 = arith.constant 0 : i32
    %c0_i32_0 = arith.constant 0 : i32
    %c0_i32_1 = arith.constant 0 : i32
    return %c0_i32, %c0_i32_0 : i32, i32
  }
  func.func @transform_2(%arg0: i32) -> (i32, i32) {
    %c0_i32 = arith.constant 0 : i32
    %c0_i32_0 = arith.constant 0 : i32
    %c0_i32_1 = arith.constant 0 : i32
    return %c0_i32, %c0_i32_0 : i32, i32
  }
  func.func @transform_3(%arg0: i32) -> (i32, i32) {
    %c0_i32 = arith.constant 0 : i32
    %c0_i32_0 = arith.constant 0 : i32
    %c0_i32_1 = arith.constant 0 : i32
    return %c0_i32, %c0_i32_0 : i32, i32
  }
  func.func @transform_4(%arg0: i32) -> (i32, i32) {
    %c0_i32 = arith.constant 0 : i32
    %c0_i32_0 = arith.constant 0 : i32
    %c0_i32_1 = arith.constant 0 : i32
    return %c0_i32, %c0_i32_0 : i32, i32
  }
  func.func @transform_5(%arg0: i32) -> (i32, i32) {
    %c0_i32 = arith.constant 0 : i32
    %c0_i32_0 = arith.constant 0 : i32
    %c0_i32_1 = arith.constant 0 : i32
    return %c0_i32, %c0_i32_0 : i32, i32
  }
  func.func @transform_6(%arg0: i32) -> (i32, i32) {
    %c0_i32 = arith.constant 0 : i32
    %c0_i32_0 = arith.constant 0 : i32
    %c0_i32_1 = arith.constant 0 : i32
    return %c0_i32, %c0_i32_0 : i32, i32
  }
  func.func @transform_7(%arg0: i32) -> (i32, i32) {
    %c0_i32 = arith.constant 0 : i32
    %c0_i32_0 = arith.constant 0 : i32
    %c0_i32_1 = arith.constant 0 : i32
    return %c0_i32, %c0_i32_0 : i32, i32
  }
}

</mosaic_0001>

<llo_original>
// kernel: net_forward.3
$region0: #{net_forward.3}
  #allocation0 [shape = 'u32[]', space=smem, size = 0x4, offset = 0x4, fixed_abs, tag = 'smem constant byte address 0x4 - core index']
  #allocation1 [shape = 'u32[144,128]{1,0:T(1,128)}', space=vmem, size = 0x12000, scoped, tag = 'internal scratch']
  %s0 = inlined_call_operand.vmem [shape: bf16[4,75,392], index: 0, kind: input, shape index: {}]
  %s1 = inlined_call_operand.vmem [shape: bf16[6,75], index: 1, kind: input, shape index: {}]
  %s2 = inlined_call_operand.vmem [shape: f32[6,1], index: 2, kind: input, shape index: {}]
  %s3 = inlined_call_operand.vmem [shape: bf16[6,392], index: 3, kind: output, shape index: {}]
  %s4 = sld [smem:[#allocation0]]
  $region83: #{net_forward.3} parent=0
    _
  %s6 = ssub.s32 1, %s4
  %s7 = scalar_select 0, %s6, %s4
  $region1: #{net_forward.3} parent=0
    #allocation2 [shape = 'u8[327680]{0}', space=vmem, size = 0x50000, scoped, tag = 'input window, operand 0']
    loop: start=0, step=1, limit=4
    $region2: #{net_forward.3} parent=1 // loop_pre_header
      _
    $region3: #{net_forward.3} parent=1 // loop_header
      %s9 = sphi 0, %s13
      %p10 = scmp.ge.s32.totalorder %s9, 4
      %s19 = sphi 0, %s21
      %s22 = sphi 0, %s19
      %s23 = sphi 0, %s22
      %s39 = sphi 0, %s23
      %s43 = sphi 0, %s43
      %s45 = sphi 0, %s43
      %s46 = sphi 0, %s45
      %s60 = sphi 0, %s46
      %s64 = sphi 0, %s64
      %s66 = sphi 0, %s64
      %s67 = sphi 0, %s66
      %s81 = sphi 0, %s67
      %s87 = sphi 0, %s89
      %s90 = sphi 0, %s87
      %s91 = sphi 0, %s90
      %s107 = sphi 0, %s91
    $region4: #{net_forward.3} parent=1 // loop_header_branch
      %12 = sbr.rel (%p10) target = $region8
    $region5: #{net_forward.3} parent=1 // loop_body
      %s14 = ssub.s32 %s9, 1
      %s15 = ssub.s32 %s9, 2
      %s16 = sadd.s32 %s9, 1
      %s17 = ssub.s32 %s9, %s16
      %p18 = scmp.eq.s32.totalorder %s17, 0
      %s20 = sadd.s32 %s19, 1
      %s21 = scalar_select %p18, %s19, %s20
      %p24 = pneg %p18
      %p25 = scmp.eq.s32.totalorder %s9, 1
      %p26 = por %p24, %p25
      %p27 = scmp.ne.s32.totalorder %s19, %s22
      %p28 = scmp.eq.s32.totalorder %s9, 0
      %p29 = por %p27, %p28
      %p30 = scmp.ne.s32.totalorder %s19, %s22
      %p31 = scmp.eq.s32.totalorder %s14, 1
      %p32 = por %p30, %p31
      %p33 = scmp.ne.s32.totalorder %s22, %s23
      %p34 = scmp.eq.s32.totalorder %s14, 0
      %p35 = por %p33, %p34
      %p36 = scmp.ne.s32.totalorder %s22, %s23
      %p37 = scmp.eq.s32.totalorder %s15, 1
      %p38 = por %p36, %p37
      %p40 = scmp.ne.s32.totalorder %s23, %s39
      %p41 = scmp.eq.s32.totalorder %s15, 0
      %p42 = por %p40, %p41
      %s44 = sadd.s32 %s43, 1
      %p47 = scmp.eq.s32.totalorder %s9, 1
      %p48 = scmp.ne.s32.totalorder %s43, %s45
      %p49 = scmp.eq.s32.totalorder %s9, 0
      %p50 = por %p48, %p49
      %p51 = scmp.ne.s32.totalorder %s43, %s45
      %p52 = scmp.eq.s32.totalorder %s14, 1
      %p53 = por %p51, %p52
      %p54 = scmp.ne.s32.totalorder %s45, %s46
      %p55 = scmp.eq.s32.totalorder %s14, 0
      %p56 = por %p54, %p55
      %p57 = scmp.ne.s32.totalorder %s45, %s46
      %p58 = scmp.eq.s32.totalorder %s15, 1
      %p59 = por %p57, %p58
      %p61 = scmp.ne.s32.totalorder %s46, %s60
      %p62 = scmp.eq.s32.totalorder %s15, 0
      %p63 = por %p61, %p62
      %s65 = sadd.s32 %s64, 1
      %p68 = scmp.eq.s32.totalorder %s9, 1
      %p69 = scmp.ne.s32.totalorder %s64, %s66
      %p70 = scmp.eq.s32.totalorder %s9, 0
      %p71 = por %p69, %p70
      %p72 = scmp.ne.s32.totalorder %s64, %s66
      %p73 = scmp.eq.s32.totalorder %s14, 1
      %p74 = por %p72, %p73
      %p75 = scmp.ne.s32.totalorder %s66, %s67
      %p76 = scmp.eq.s32.totalorder %s14, 0
      %p77 = por %p75, %p76
      %p78 = scmp.ne.s32.totalorder %s66, %s67
      %p79 = scmp.eq.s32.totalorder %s15, 1
      %p80 = por %p78, %p79
      %p82 = scmp.ne.s32.totalorder %s67, %s81
      %p83 = scmp.eq.s32.totalorder %s15, 0
      %p84 = por %p82, %p83
      %s85 = ssub.s32 %s9, %s16
      %p86 = scmp.eq.s32.totalorder %s85, 0
      %s88 = sadd.s32 %s87, 1
      %s89 = scalar_select %p86, %s87, %s88
      %p92 = pneg %p86
      %p93 = scmp.eq.s32.totalorder %s9, 1
      %p94 = por %p92, %p93
      %p95 = scmp.ne.s32.totalorder %s87, %s90
      %p96 = scmp.eq.s32.totalorder %s9, 0
      %p97 = por %p95, %p96
      %p98 = scmp.ne.s32.totalorder %s87, %s90
      %p99 = scmp.eq.s32.totalorder %s14, 1
      %p100 = por %p98, %p99
      %p101 = scmp.ne.s32.totalorder %s90, %s91
      %p102 = scmp.eq.s32.totalorder %s14, 0
      %p103 = por %p101, %p102
      %p104 = scmp.ne.s32.totalorder %s90, %s91
      %p105 = scmp.eq.s32.totalorder %s15, 1
      %p106 = por %p104, %p105
      %p108 = scmp.ne.s32.totalorder %s91, %s107
      %p109 = scmp.eq.s32.totalorder %s15, 0
      %p110 = por %p108, %p109
      %p111 = scmp.le.s32.totalorder 1, %s9
      %p112 = scmp.lt.s32.totalorder %s9, 3
      %p113 = pnand %p111, %p112
      %p114 = pneg %p113
      // Predicated region
      $region9: #{net_forward.3} parent=5 // pred_check
        _
      $region10: #{net_forward.3} parent=5 // pred_check_branch
        %116 = sbr.rel (%p113) target = $region12
      $region11: #{net_forward.3} parent=5 // pred_region
        %s117 = ssub.s32 %s9, 1
        // Predicated region
        $region13: #{net_forward.3} parent=11 // pred_check
          %p118 = pneg %p56
        $region14: #{net_forward.3} parent=11 // pred_check_branch
          %120 = sbr.rel (%p118) target = $region16
        $region15: #{net_forward.3} parent=11 // pred_region
          _
        $region16: #{net_forward.3} parent=11 // pred_fallthru
          _
        // Predicated region
        $region17: #{net_forward.3} parent=11 // pred_check
          %p121 = pneg %p77
        $region18: #{net_forward.3} parent=11 // pred_check_branch
          %123 = sbr.rel (%p121) target = $region20
        $region19: #{net_forward.3} parent=11 // pred_region
          _
        $region20: #{net_forward.3} parent=11 // pred_fallthru
          _
      $region12: #{net_forward.3} parent=5 // pred_fallthru
        _
      %p124 = scmp.lt.s32.totalorder %s9, 2
      // Predicated region
      $region21: #{net_forward.3} parent=5 // pred_check
        %p125 = pneg %p124
      $region22: #{net_forward.3} parent=5 // pred_check_branch
        %127 = sbr.rel (%p125) target = $region24
      $region23: #{net_forward.3} parent=5 // pred_region
        // Predicated region
        $region25: #{net_forward.3} parent=23 // pred_check
          %p128 = pneg %p29
        $region26: #{net_forward.3} parent=23 // pred_check_branch
          %130 = sbr.rel (%p128) target = $region28
        $region27: #{net_forward.3} parent=23 // pred_region
          %s131 = sand.u32 %s19, 1
          %s132 = sand.u32 %s19, 1
          %s133 = smul.addr %s132, 320
          %s134 = scalar_lea.vmem [#allocation2], %s133
          %s135 = smul.u32 2, %s9
          %s136 = smul.addr %s135, 4
          %s137 = scalar_lea.vmem %s0, %s136
          // Predicated region
          $region29: #{net_forward.3} parent=27 // pred_check
            _
          $region30: #{net_forward.3} parent=27 // pred_check_branch
            %139 = sbr.rel (0) target = $region32
          $region31: #{net_forward.3} parent=27 // pred_region
            // Predicated region
            $region33: #{net_forward.3} parent=31 // pred_check
              _
            $region34: #{net_forward.3} parent=31 // pred_check_branch
              %141 = sbr.rel (0) target = $region36
            $region35: #{net_forward.3} parent=31 // pred_region
              // Predicated region
              $region48: #{net_forward.3} parent=35 // pred_check
                _
              $region49: #{net_forward.3} parent=35 // pred_check_branch
                %234 = sbr.rel (0) target = $region51
              $region50: #{net_forward.3} parent=35 // pred_region
                loop: start=0, step=1, limit=1
                $region52: #{net_forward.3} parent=50 // loop_pre_header
                  _
                $region53: #{net_forward.3} parent=50 // loop_header
                  %s236 = sphi 0, %s240
                  %p237 = scmp.ge.s32.totalorder %s236, 1
                  %s241 = sphi %s137, %s137
                  %s242 = sphi %s134, %s134
                $region54: #{net_forward.3} parent=50 // loop_header_branch
                  %239 = sbr.rel (%p237) target = $region58
                $region55: #{net_forward.3} parent=50 // loop_body
                  %v243 = vld [vmem:[%s241] sm:$0xff]
                  %244 = vst [vmem:[%s242] sm:$0xff] %v243
                  %v245 = vld [vmem:[%s241 + $0x10] sm:$0xff]
                  %246 = vst [vmem:[%s242 + $0x8] sm:$0xff] %v245
                  %v247 = vld [vmem:[%s241 + $0x20] sm:$0xff]
                  %248 = vst [vmem:[%s242 + $0x10] sm:$0xff] %v247
                  %v249 = vld [vmem:[%s241 + $0x30] sm:$0xff]
                  %250 = vst [vmem:[%s242 + $0x18] sm:$0xff] %v249
                  %v251 = vld [vmem:[%s241 + $0x40] sm:$0xff]
                  %252 = vst [vmem:[%s242 + $0x20] sm:$0xff] %v251
                  %v253 = vld [vmem:[%s241 + $0x50] sm:$0xff]
                  %254 = vst [vmem:[%s242 + $0x28] sm:$0xff] %v253
                  %v255 = vld [vmem:[%s241 + $0x60] sm:$0xff]
                  %256 = vst [vmem:[%s242 + $0x30] sm:$0xff] %v255
                  %v257 = vld [vmem:[%s241 + $0x70] sm:$0xff]
                  %258 = vst [vmem:[%s242 + $0x38] sm:$0xff] %v257
                  %v259 = vld [vmem:[%s241 + $0x80] sm:$0xff]
                  %260 = vst [vmem:[%s242 + $0x40] sm:$0xff] %v259
                  %v261 = vld [vmem:[%s241 + $0x90] sm:$0xff]
                  %262 = vst [vmem:[%s242 + $0x48] sm:$0xff] %v261
                  %v263 = vld [vmem:[%s241 + $0xa0] sm:$0xff]
                  %264 = vst [vmem:[%s242 + $0x50] sm:$0xff] %v263
                  %v265 = vld [vmem:[%s241 + $0xb0] sm:$0xff]
                  %266 = vst [vmem:[%s242 + $0x58] sm:$0xff] %v265
                  %v267 = vld [vmem:[%s241 + $0xc0] sm:$0xff]
                  %268 = vst [vmem:[%s242 + $0x60] sm:$0xff] %v267
                  %v269 = vld [vmem:[%s241 + $0xd0] sm:$0xff]
                  %270 = vst [vmem:[%s242 + $0x68] sm:$0xff] %v269
                  %v271 = vld [vmem:[%s241 + $0xe0] sm:$0xff]
                  %272 = vst [vmem:[%s242 + $0x70] sm:$0xff] %v271
                  %v273 = vld [vmem:[%s241 + $0xf0] sm:$0xff]
                  %274 = vst [vmem:[%s242 + $0x78] sm:$0xff] %v273
                  %v275 = vld [vmem:[%s241 + $0x100] sm:$0xff]
                  %276 = vst [vmem:[%s242 + $0x80] sm:$0xff] %v275
                  %v277 = vld [vmem:[%s241 + $0x110] sm:$0xff]
                  %278 = vst [vmem:[%s242 + $0x88] sm:$0xff] %v277
                  %v279 = vld [vmem:[%s241 + $0x120] sm:$0xff]
                  %280 = vst [vmem:[%s242 + $0x90] sm:$0xff] %v279
                  %v281 = vld [vmem:[%s241 + $0x130] sm:$0xff]
                  %282 = vst [vmem:[%s242 + $0x98] sm:$0xff] %v281
                  %v283 = vld [vmem:[%s241 + $0x140] sm:$0xff]
                  %284 = vst [vmem:[%s242 + $0xa0] sm:$0xff] %v283
                  %v285 = vld [vmem:[%s241 + $0x150] sm:$0xff]
                  %286 = vst [vmem:[%s242 + $0xa8] sm:$0xff] %v285
                  %v287 = vld [vmem:[%s241 + $0x160] sm:$0xff]
                  %288 = vst [vmem:[%s242 + $0xb0] sm:$0xff] %v287
                  %v289 = vld [vmem:[%s241 + $0x170] sm:$0xff]
                  %290 = vst [vmem:[%s242 + $0xb8] sm:$0xff] %v289
                  %v291 = vld [vmem:[%s241 + $0x180] sm:$0xff]
                  %292 = vst [vmem:[%s242 + $0xc0] sm:$0xff] %v291
                  %v293 = vld [vmem:[%s241 + $0x190] sm:$0xff]
                  %294 = vst [vmem:[%s242 + $0xc8] sm:$0xff] %v293
                  %v295 = vld [vmem:[%s241 + $0x1a0] sm:$0xff]
                  %296 = vst [vmem:[%s242 + $0xd0] sm:$0xff] %v295
                  %v297 = vld [vmem:[%s241 + $0x1b0] sm:$0xff]
                  %298 = vst [vmem:[%s242 + $0xd8] sm:$0xff] %v297
                  %v299 = vld [vmem:[%s241 + $0x1c0] sm:$0xff]
                  %300 = vst [vmem:[%s242 + $0xe0] sm:$0xff] %v299
                  %v301 = vld [vmem:[%s241 + $0x1d0] sm:$0xff]
                  %302 = vst [vmem:[%s242 + $0xe8] sm:$0xff] %v301
                  %v303 = vld [vmem:[%s241 + $0x1e0] sm:$0xff]
                  %304 = vst [vmem:[%s242 + $0xf0] sm:$0xff] %v303
                  %v305 = vld [vmem:[%s241 + $0x1f0] sm:$0xff]
                  %306 = vst [vmem:[%s242 + $0xf8] sm:$0xff] %v305
                  %v307 = vld [vmem:[%s241 + $0x200] sm:$0xff]
                  %308 = vst [vmem:[%s242 + $0x100] sm:$0xff] %v307
                  %v309 = vld [vmem:[%s241 + $0x210] sm:$0xff]
                  %310 = vst [vmem:[%s242 + $0x108] sm:$0xff] %v309
                  %v311 = vld [vmem:[%s241 + $0x220] sm:$0xff]
                  %312 = vst [vmem:[%s242 + $0x110] sm:$0xff] %v311
                  %v313 = vld [vmem:[%s241 + $0x230] sm:$0xff]
                  %314 = vst [vmem:[%s242 + $0x118] sm:$0xff] %v313
                  %v315 = vld [vmem:[%s241 + $0x240] sm:$0xff]
                  %316 = vst [vmem:[%s242 + $0x120] sm:$0xff] %v315
                  %v317 = vld [vmem:[%s241 + $0x250] sm:$0xff]
                  %318 = vst [vmem:[%s242 + $0x128] sm:$0xff] %v317
                  %v319 = vld [vmem:[%s241 + $0x260] sm:$0xff]
                  %320 = vst [vmem:[%s242 + $0x130] sm:$0xff] %v319
                  %v321 = vld [vmem:[%s241 + $0x270] sm:$0xff]
                  %322 = vst [vmem:[%s242 + $0x138] sm:$0xff] %v321
                $region56: #{net_forward.3} parent=50 // loop_footer
                  %s240 = sadd.s32 1, %s236
                $region57: #{net_forward.3} parent=50 // loop_footer_branch
                  %235 = sbr.rel target = $region53
                $region58: #{net_forward.3} parent=50 // loop_exit
                  _
              $region51: #{net_forward.3} parent=35 // pred_fallthru
                _
              // Predicated region
              $region59: #{net_forward.3} parent=35 // pred_check
                _
              $region60: #{net_forward.3} parent=35 // pred_check_branch
                %324 = sbr.rel target = $region62
              $region61: #{net_forward.3} parent=35 // pred_region
                _
              $region62: #{net_forward.3} parent=35 // pred_fallthru
                _
            $region36: #{net_forward.3} parent=31 // pred_fallthru
              _
            // Predicated region
            $region37: #{net_forward.3} parent=31 // pred_check
              _
            $region38: #{net_forward.3} parent=31 // pred_check_branch
              %143 = sbr.rel target = $region40
            $region39: #{net_forward.3} parent=31 // pred_region
              loop: start=0, step=1, limit=1
              $region41: #{net_forward.3} parent=39 // loop_pre_header
                _
              $region42: #{net_forward.3} parent=39 // loop_header
                %s146 = sphi 0, %s150
                %p147 = scmp.ge.s32.totalorder %s146, 1
                %s151 = sphi %s137, %s137
                %s152 = sphi %s134, %s134
              $region43: #{net_forward.3} parent=39 // loop_header_branch
                %149 = sbr.rel (%p147) target = $region47
              $region44: #{net_forward.3} parent=39 // loop_body
                %v153 = vld [vmem:[%s151] sm:$0xff]
                %154 = vst [vmem:[%s152] sm:$0xff] %v153
                %v155 = vld [vmem:[%s151 + $0x10] sm:$0xff]
                %156 = vst [vmem:[%s152 + $0x8] sm:$0xff] %v155
                %v157 = vld [vmem:[%s151 + $0x20] sm:$0xff]
                %158 = vst [vmem:[%s152 + $0x10] sm:$0xff] %v157
                %v159 = vld [vmem:[%s151 + $0x30] sm:$0xff]
                %160 = vst [vmem:[%s152 + $0x18] sm:$0xff] %v159
                %v161 = vld [vmem:[%s151 + $0x40] sm:$0xff]
                %162 = vst [vmem:[%s152 + $0x20] sm:$0xff] %v161
                %v163 = vld [vmem:[%s151 + $0x50] sm:$0xff]
                %164 = vst [vmem:[%s152 + $0x28] sm:$0xff] %v163
                %v165 = vld [vmem:[%s151 + $0x60] sm:$0xff]
                %166 = vst [vmem:[%s152 + $0x30] sm:$0xff] %v165
                %v167 = vld [vmem:[%s151 + $0x70] sm:$0xff]
                %168 = vst [vmem:[%s152 + $0x38] sm:$0xff] %v167
                %v169 = vld [vmem:[%s151 + $0x80] sm:$0xff]
                %170 = vst [vmem:[%s152 + $0x40] sm:$0xff] %v169
                %v171 = vld [vmem:[%s151 + $0x90] sm:$0xff]
                %172 = vst [vmem:[%s152 + $0x48] sm:$0xff] %v171
                %v173 = vld [vmem:[%s151 + $0xa0] sm:$0xff]
                %174 = vst [vmem:[%s152 + $0x50] sm:$0xff] %v173
                %v175 = vld [vmem:[%s151 + $0xb0] sm:$0xff]
                %176 = vst [vmem:[%s152 + $0x58] sm:$0xff] %v175
                %v177 = vld [vmem:[%s151 + $0xc0] sm:$0xff]
                %178 = vst [vmem:[%s152 + $0x60] sm:$0xff] %v177
                %v179 = vld [vmem:[%s151 + $0xd0] sm:$0xff]
                %180 = vst [vmem:[%s152 + $0x68] sm:$0xff] %v179
                %v181 = vld [vmem:[%s151 + $0xe0] sm:$0xff]
                %182 = vst [vmem:[%s152 + $0x70] sm:$0xff] %v181
                %v183 = vld [vmem:[%s151 + $0xf0] sm:$0xff]
                %184 = vst [vmem:[%s152 + $0x78] sm:$0xff] %v183
                %v185 = vld [vmem:[%s151 + $0x100] sm:$0xff]
                %186 = vst [vmem:[%s152 + $0x80] sm:$0xff] %v185
                %v187 = vld [vmem:[%s151 + $0x110] sm:$0xff]
                %188 = vst [vmem:[%s152 + $0x88] sm:$0xff] %v187
                %v189 = vld [vmem:[%s151 + $0x120] sm:$0xff]
                %190 = vst [vmem:[%s152 + $0x90] sm:$0xff] %v189
                %v191 = vld [vmem:[%s151 + $0x130] sm:$0xff]
                %192 = vst [vmem:[%s152 + $0x98] sm:$0xff] %v191
                %v193 = vld [vmem:[%s151 + $0x140] sm:$0xff]
                %194 = vst [vmem:[%s152 + $0xa0] sm:$0xff] %v193
                %v195 = vld [vmem:[%s151 + $0x150] sm:$0xff]
                %196 = vst [vmem:[%s152 + $0xa8] sm:$0xff] %v195
                %v197 = vld [vmem:[%s151 + $0x160] sm:$0xff]
                %198 = vst [vmem:[%s152 + $0xb0] sm:$0xff] %v197
                %v199 = vld [vmem:[%s151 + $0x170] sm:$0xff]
                %200 = vst [vmem:[%s152 + $0xb8] sm:$0xff] %v199
                %v201 = vld [vmem:[%s151 + $0x180] sm:$0xff]
                %202 = vst [vmem:[%s152 + $0xc0] sm:$0xff] %v201
                %v203 = vld [vmem:[%s151 + $0x190] sm:$0xff]
                %204 = vst [vmem:[%s152 + $0xc8] sm:$0xff] %v203
                %v205 = vld [vmem:[%s151 + $0x1a0] sm:$0xff]
                %206 = vst [vmem:[%s152 + $0xd0] sm:$0xff] %v205
                %v207 = vld [vmem:[%s151 + $0x1b0] sm:$0xff]
                %208 = vst [vmem:[%s152 + $0xd8] sm:$0xff] %v207
                %v209 = vld [vmem:[%s151 + $0x1c0] sm:$0xff]
                %210 = vst [vmem:[%s152 + $0xe0] sm:$0xff] %v209
                %v211 = vld [vmem:[%s151 + $0x1d0] sm:$0xff]
                %212 = vst [vmem:[%s152 + $0xe8] sm:$0xff] %v211
                %v213 = vld [vmem:[%s151 + $0x1e0] sm:$0xff]
                %214 = vst [vmem:[%s152 + $0xf0] sm:$0xff] %v213
                %v215 = vld [vmem:[%s151 + $0x1f0] sm:$0xff]
                %216 = vst [vmem:[%s152 + $0xf8] sm:$0xff] %v215
                %v217 = vld [vmem:[%s151 + $0x200] sm:$0xff]
                %218 = vst [vmem:[%s152 + $0x100] sm:$0xff] %v217
                %v219 = vld [vmem:[%s151 + $0x210] sm:$0xff]
                %220 = vst [vmem:[%s152 + $0x108] sm:$0xff] %v219
                %v221 = vld [vmem:[%s151 + $0x220] sm:$0xff]
                %222 = vst [vmem:[%s152 + $0x110] sm:$0xff] %v221
                %v223 = vld [vmem:[%s151 + $0x230] sm:$0xff]
                %224 = vst [vmem:[%s152 + $0x118] sm:$0xff] %v223
                %v225 = vld [vmem:[%s151 + $0x240] sm:$0xff]
                %226 = vst [vmem:[%s152 + $0x120] sm:$0xff] %v225
                %v227 = vld [vmem:[%s151 + $0x250] sm:$0xff]
                %228 = vst [vmem:[%s152 + $0x128] sm:$0xff] %v227
                %v229 = vld [vmem:[%s151 + $0x260] sm:$0xff]
                %230 = vst [vmem:[%s152 + $0x130] sm:$0xff] %v229
                %v231 = vld [vmem:[%s151 + $0x270] sm:$0xff]
                %232 = vst [vmem:[%s152 + $0x138] sm:$0xff] %v231
              $region45: #{net_forward.3} parent=39 // loop_footer
                %s150 = sadd.s32 1, %s146
              $region46: #{net_forward.3} parent=39 // loop_footer_branch
                %145 = sbr.rel target = $region42
              $region47: #{net_forward.3} parent=39 // loop_exit
                _
            $region40: #{net_forward.3} parent=31 // pred_fallthru
              _
          $region32: #{net_forward.3} parent=27 // pred_fallthru
            _
          %325 = vnop
        $region28: #{net_forward.3} parent=23 // pred_fallthru
          _
      $region24: #{net_forward.3} parent=5 // pred_fallthru
        _
      %p326 = scmp.le.s32.totalorder 1, %s9
      %p327 = scmp.lt.s32.totalorder %s9, 3
      %p328 = pnand %p326, %p327
      %p329 = pneg %p328
      // Predicated region
      $region63: #{net_forward.3} parent=5 // pred_check
        _
      $region64: #{net_forward.3} parent=5 // pred_check_branch
        %331 = sbr.rel (%p328) target = $region66
      $region65: #{net_forward.3} parent=5 // pred_region
        %s332 = ssub.s32 %s9, 1
        %s333 = sand.u32 %s22, 1
        %s334 = sand.u32 %s22, 1
        %s335 = smul.addr %s334, 320
        %s336 = scalar_lea.vmem [#allocation2], %s335
        // Predicated region
        $region67: #{net_forward.3} parent=65 // pred_check
          %p337 = pneg %p35
        $region68: #{net_forward.3} parent=65 // pred_check_branch
          %339 = sbr.rel (%p337) target = $region70
        $region69: #{net_forward.3} parent=65 // pred_region
          _
        $region70: #{net_forward.3} parent=65 // pred_fallthru
          _
        %s340 = sand.u32 %s22, 1
        %s341 = sand.u32 %s22, 1
        %s342 = smul.addr %s341, 320
        %s343 = scalar_lea.vmem [#allocation2], %s342
        %p344 = pneg %p35
        %p345 = pneg %p32
        %p346 = pneg %p56
        %p347 = pneg %p53
        %p348 = pneg %p77
        %p349 = pneg %p74
        %p350 = pneg %p103
        %p351 = pneg %p100
        %s352 = smul.u32 2, %s14
        %p353 = scmp.lt.s32.totalorder %s352, 3
        %s354 = scalar_select %p353, %s352, 3
        %s355 = smul.addr %s354, 4
        %s356 = scalar_lea.vmem %s3, %s355
        %s357 = smul.u32 2, %s14
        %s358 = smul.u32 2, %s14
        %p359 = scmp.lt.s32.totalorder %s358, 3
        %s360 = scalar_select %p359, %s358, 3
        %s361 = smul.addr %s360, 4
        %s362 = scalar_lea.vmem %s3, %s361
        %s363 = smul.u32 2, %s14
        %v365 = vld [vmem:[%s1] sm:$0x7]
        %v366 = vld [vmem:[%s336] sm:$0xff]
        %v367 = vld [vmem:[%s336 + $0x8] sm:$0xff]
        %v368 = vld [vmem:[%s336 + $0x10] sm:$0xff]
        %v369 = vld [vmem:[%s336 + $0x18] sm:$0xff]
        %v370 = vld [vmem:[%s336 + $0x20] sm:$0xff]
        %v371 = vld [vmem:[%s336 + $0x28] sm:$0xff]
        %v372 = vld [vmem:[%s336 + $0x30] sm:$0xff]
        %v373 = vld [vmem:[%s336 + $0x38] sm:$0xff]
        %v374 = vld [vmem:[%s336 + $0x40] sm:$0xff]
        %v375 = vld [vmem:[%s336 + $0x48] sm:$0x33]
        %v386 = vunpack.c.l.b16 %v366
        %v387 = vunpack.c.h.b16 %v366
        %v388 = vunpack.c.l.b16 %v367
        %v389 = vunpack.c.h.b16 %v367
        %v390 = vunpack.c.l.b16 %v368
        %v391 = vunpack.c.h.b16 %v368
        %v392 = vunpack.c.l.b16 %v369
        %v393 = vunpack.c.h.b16 %v369
        %v394 = vunpack.c.l.b16 %v370
        %v395 = vunpack.c.h.b16 %v370
        %v396 = vunpack.c.l.b16 %v371
        %v397 = vunpack.c.h.b16 %v371
        %v398 = vunpack.c.l.b16 %v372
        %v399 = vunpack.c.h.b16 %v372
        %v400 = vunpack.c.l.b16 %v373
        %v401 = vunpack.c.h.b16 %v373
        %v402 = vunpack.c.l.b16 %v374
        %v403 = vunpack.c.h.b16 %v374
        %v404 = vunpack.c.l.b16 %v375
        %v405 = vunpack.c.h.b16 %v375
        %v406 = vpack.c.b16 %v388, %v386
        %v407 = vpack.c.b16 %v389, %v387
        %v408 = vpack.c.b16 %v392, %v390
        %v409 = vpack.c.b16 %v393, %v391
        %v410 = vpack.c.b16 %v396, %v394
        %v411 = vpack.c.b16 %v397, %v395
        %v412 = vpack.c.b16 %v400, %v398
        %v413 = vpack.c.b16 %v401, %v399
        %v414 = vpack.c.b16 %v404, %v402
        %v415 = vpack.c.b16 %v405, %v403
        %vm424 = vcmask 613376
        %v426 = vsel %vm424, %v365, 0
        %vm428 = vcmask 1044480
        %vm429 = vcmask 1045504
        %v430 = vsel %vm428, 4294967295, 65535
        %v431 = vsel %vm429, %v430, 0
        %v433 = vand.u32 %v414, %v431
        %v436 = vand.u32 %v415, %v431
        %438 = vmatprep.subr.bf16.mxu0 %v407
        %439 = vmatpush1.bf16.msra.mxu0 %v406
        %440 = vmatprep.subr.bf16.mxu0 %v409
        %441 = vmatpush1.bf16.msra.mxu0 %v408
        %442 = vmatprep.subr.bf16.mxu0 %v411
        %443 = vmatpush1.bf16.msra.mxu0 %v410
        %444 = vmatprep.subr.bf16.mxu0 %v413
        %445 = vmatpush1.bf16.msra.mxu0 %v412
        %446 = vmatprep.subr.bf16.mxu0 %v436
        %447 = vmatpush1.bf16.msra.mxu0 %v433
        %448 = vmatprep.subr.bf16.mxu0 0
        %449 = vmatpush1.bf16.msra.mxu0 0
        %450 = vmatprep.subr.bf16.mxu0 0
        %451 = vmatpush1.bf16.msra.mxu0 0
        %452 = vmatprep.subr.bf16.mxu0 0
        %453 = vmatpush1.bf16.msra.mxu0 0
        %454 = vmatprep.subr.bf16.mxu0 0
        %455 = vmatpush1.bf16.msra.mxu0 0
        %456 = vmatprep.subr.bf16.mxu0 0
        %457 = vmatpush1.bf16.msra.mxu0 0
        %458 = vmatprep.subr.bf16.mxu0 0
        %459 = vmatpush1.bf16.msra.mxu0 0
        %460 = vmatprep.subr.bf16.mxu0 0
        %461 = vmatpush1.bf16.msra.mxu0 0
        %462 = vmatprep.subr.bf16.mxu0 0
        %463 = vmatpush1.bf16.msra.mxu0 0
        %464 = vmatprep.subr.bf16.mxu0 0
        %465 = vmatpush1.bf16.msra.mxu0 0
        %466 = vmatprep.subr.bf16.mxu0 0
        %467 = vmatpush1.bf16.msra.mxu0 0
        %468 = vmatprep.subr.bf16.mxu0 0
        %469 = vmatpush1.bf16.msra.mxu0 0
        %470 = vmatprep.mubr.bf16.mxu0 0
        %471 = vmatmul.mubr.bf16.gmra.mrb[0].mxu0 %v426
        %v472 = vpop.f32.mrb[0].mxu0
        %v473 = vadd.f32 0.0, %v472
        %v474 = vpop.f32.mrb[0].mxu0
        %v475 = vadd.f32 0.0, %v474
        %v476 = vpop.f32.mrb[0].mxu0
        %v477 = vpop.f32.mrb[0].mxu0
        %478 = vdwg.mxu0
        %s479 = scalar_lea.vmem %s336, 80 [#allocation2]
        %v480 = vld [vmem:[%s479] sm:$0xff]
        %v481 = vld [vmem:[%s479 + $0x8] sm:$0xff]
        %v482 = vld [vmem:[%s479 + $0x10] sm:$0xff]
        %v483 = vld [vmem:[%s479 + $0x18] sm:$0xff]
        %v484 = vld [vmem:[%s479 + $0x20] sm:$0xff]
        %v485 = vld [vmem:[%s479 + $0x28] sm:$0xff]
        %v486 = vld [vmem:[%s479 + $0x30] sm:$0xff]
        %v487 = vld [vmem:[%s479 + $0x38] sm:$0xff]
        %v488 = vld [vmem:[%s479 + $0x40] sm:$0xff]
        %v489 = vld [vmem:[%s479 + $0x48] sm:$0x33]
        %v500 = vunpack.c.l.b16 %v480
        %v501 = vunpack.c.h.b16 %v480
        %v502 = vunpack.c.l.b16 %v481
        %v503 = vunpack.c.h.b16 %v481
        %v504 = vunpack.c.l.b16 %v482
        %v505 = vunpack.c.h.b16 %v482
        %v506 = vunpack.c.l.b16 %v483
        %v507 = vunpack.c.h.b16 %v483
        %v508 = vunpack.c.l.b16 %v484
        %v509 = vunpack.c.h.b16 %v484
        %v510 = vunpack.c.l.b16 %v485
        %v511 = vunpack.c.h.b16 %v485
        %v512 = vunpack.c.l.b16 %v486
        %v513 = vunpack.c.h.b16 %v486
        %v514 = vunpack.c.l.b16 %v487
        %v515 = vunpack.c.h.b16 %v487
        %v516 = vunpack.c.l.b16 %v488
        %v517 = vunpack.c.h.b16 %v488
        %v518 = vunpack.c.l.b16 %v489
        %v519 = vunpack.c.h.b16 %v489
        %v520 = vpack.c.b16 %v502, %v500
        %v521 = vpack.c.b16 %v503, %v501
        %v522 = vpack.c.b16 %v506, %v504
        %v523 = vpack.c.b16 %v507, %v505
        %v524 = vpack.c.b16 %v510, %v508
        %v525 = vpack.c.b16 %v511, %v509
        %v526 = vpack.c.b16 %v514, %v512
        %v527 = vpack.c.b16 %v515, %v513
        %v528 = vpack.c.b16 %v518, %v516
        %v529 = vpack.c.b16 %v519, %v517
        %v539 = vand.u32 %v528, %v431
        %v542 = vand.u32 %v529, %v431
        %544 = vmatprep.subr.bf16.mxu0 %v521
        %545 = vmatpush1.bf16.msra.mxu0 %v520
        %546 = vmatprep.subr.bf16.mxu0 %v523
        %547 = vmatpush1.bf16.msra.mxu0 %v522
        %548 = vmatprep.subr.bf16.mxu0 %v525
        %549 = vmatpush1.bf16.msra.mxu0 %v524
        %550 = vmatprep.subr.bf16.mxu0 %v527
        %551 = vmatpush1.bf16.msra.mxu0 %v526
        %552 = vmatprep.subr.bf16.mxu0 %v542
        %553 = vmatpush1.bf16.msra.mxu0 %v539
        %554 = vmatprep.subr.bf16.mxu0 0
        %555 = vmatpush1.bf16.msra.mxu0 0
        %556 = vmatprep.subr.bf16.mxu0 0
        %557 = vmatpush1.bf16.msra.mxu0 0
        %558 = vmatprep.subr.bf16.mxu0 0
        %559 = vmatpush1.bf16.msra.mxu0 0
        %560 = vmatprep.subr.bf16.mxu0 0
        %561 = vmatpush1.bf16.msra.mxu0 0
        %562 = vmatprep.subr.bf16.mxu0 0
        %563 = vmatpush1.bf16.msra.mxu0 0
        %564 = vmatprep.subr.bf16.mxu0 0
        %565 = vmatpush1.bf16.msra.mxu0 0
        %566 = vmatprep.subr.bf16.mxu0 0
        %567 = vmatpush1.bf16.msra.mxu0 0
        %568 = vmatprep.subr.bf16.mxu0 0
        %569 = vmatpush1.bf16.msra.mxu0 0
        %570 = vmatprep.subr.bf16.mxu0 0
        %571 = vmatpush1.bf16.msra.mxu0 0
        %572 = vmatprep.subr.bf16.mxu0 0
        %573 = vmatpush1.bf16.msra.mxu0 0
        %574 = vmatprep.subr.bf16.mxu0 0
        %575 = vmatpush1.bf16.msra.mxu0 0
        %576 = vmatprep.mubr.bf16.mxu0 0
        %577 = vmatmul.mubr.bf16.gmra.mrb[0].mxu0 %v426
        %v578 = vpop.f32.mrb[0].mxu0
        %v579 = vadd.f32 0.0, %v578
        %v580 = vpop.f32.mrb[0].mxu0
        %v581 = vadd.f32 0.0, %v580
        %v582 = vpop.f32.mrb[0].mxu0
        %v583 = vpop.f32.mrb[0].mxu0
        %584 = vdwg.mxu0
        %s585 = scalar_lea.vmem %s336, 160 [#allocation2]
        %v586 = vld [vmem:[%s585] sm:$0xff]
        %v587 = vld [vmem:[%s585 + $0x8] sm:$0xff]
        %v588 = vld [vmem:[%s585 + $0x10] sm:$0xff]
        %v589 = vld [vmem:[%s585 + $0x18] sm:$0xff]
        %v590 = vld [vmem:[%s585 + $0x20] sm:$0xff]
        %v591 = vld [vmem:[%s585 + $0x28] sm:$0xff]
        %v592 = vld [vmem:[%s585 + $0x30] sm:$0xff]
        %v593 = vld [vmem:[%s585 + $0x38] sm:$0xff]
        %v594 = vld [vmem:[%s585 + $0x40] sm:$0xff]
        %v595 = vld [vmem:[%s585 + $0x48] sm:$0x33]
        %v606 = vunpack.c.l.b16 %v586
        %v607 = vunpack.c.h.b16 %v586
        %v608 = vunpack.c.l.b16 %v587
        %v609 = vunpack.c.h.b16 %v587
        %v610 = vunpack.c.l.b16 %v588
        %v611 = vunpack.c.h.b16 %v588
        %v612 = vunpack.c.l.b16 %v589
        %v613 = vunpack.c.h.b16 %v589
        %v614 = vunpack.c.l.b16 %v590
        %v615 = vunpack.c.h.b16 %v590
        %v616 = vunpack.c.l.b16 %v591
        %v617 = vunpack.c.h.b16 %v591
        %v618 = vunpack.c.l.b16 %v592
        %v619 = vunpack.c.h.b16 %v592
        %v620 = vunpack.c.l.b16 %v593
        %v621 = vunpack.c.h.b16 %v593
        %v622 = vunpack.c.l.b16 %v594
        %v623 = vunpack.c.h.b16 %v594
        %v624 = vunpack.c.l.b16 %v595
        %v625 = vunpack.c.h.b16 %v595
        %v626 = vpack.c.b16 %v608, %v606
        %v627 = vpack.c.b16 %v609, %v607
        %v628 = vpack.c.b16 %v612, %v610
        %v629 = vpack.c.b16 %v613, %v611
        %v630 = vpack.c.b16 %v616, %v614
        %v631 = vpack.c.b16 %v617, %v615
        %v632 = vpack.c.b16 %v620, %v618
        %v633 = vpack.c.b16 %v621, %v619
        %v634 = vpack.c.b16 %v624, %v622
        %v635 = vpack.c.b16 %v625, %v623
        %v645 = vand.u32 %v634, %v431
        %v648 = vand.u32 %v635, %v431
        %650 = vmatprep.subr.bf16.mxu0 %v627
        %651 = vmatpush1.bf16.msra.mxu0 %v626
        %652 = vmatprep.subr.bf16.mxu0 %v629
        %653 = vmatpush1.bf16.msra.mxu0 %v628
        %654 = vmatprep.subr.bf16.mxu0 %v631
        %655 = vmatpush1.bf16.msra.mxu0 %v630
        %656 = vmatprep.subr.bf16.mxu0 %v633
        %657 = vmatpush1.bf16.msra.mxu0 %v632
        %658 = vmatprep.subr.bf16.mxu0 %v648
        %659 = vmatpush1.bf16.msra.mxu0 %v645
        %660 = vmatprep.subr.bf16.mxu0 0
        %661 = vmatpush1.bf16.msra.mxu0 0
        %662 = vmatprep.subr.bf16.mxu0 0
        %663 = vmatpush1.bf16.msra.mxu0 0
        %664 = vmatprep.subr.bf16.mxu0 0
        %665 = vmatpush1.bf16.msra.mxu0 0
        %666 = vmatprep.subr.bf16.mxu0 0
        %667 = vmatpush1.bf16.msra.mxu0 0
        %668 = vmatprep.subr.bf16.mxu0 0
        %669 = vmatpush1.bf16.msra.mxu0 0
        %670 = vmatprep.subr.bf16.mxu0 0
        %671 = vmatpush1.bf16.msra.mxu0 0
        %672 = vmatprep.subr.bf16.mxu0 0
        %673 = vmatpush1.bf16.msra.mxu0 0
        %674 = vmatprep.subr.bf16.mxu0 0
        %675 = vmatpush1.bf16.msra.mxu0 0
        %676 = vmatprep.subr.bf16.mxu0 0
        %677 = vmatpush1.bf16.msra.mxu0 0
        %678 = vmatprep.subr.bf16.mxu0 0
        %679 = vmatpush1.bf16.msra.mxu0 0
        %680 = vmatprep.subr.bf16.mxu0 0
        %681 = vmatpush1.bf16.msra.mxu0 0
        %682 = vmatprep.mubr.bf16.mxu0 0
        %683 = vmatmul.mubr.bf16.gmra.mrb[0].mxu0 %v426
        %v684 = vpop.f32.mrb[0].mxu0
        %v685 = vadd.f32 0.0, %v684
        %v686 = vpop.f32.mrb[0].mxu0
        %v687 = vadd.f32 0.0, %v686
        %v688 = vpop.f32.mrb[0].mxu0
        %v689 = vpop.f32.mrb[0].mxu0
        %690 = vdwg.mxu0
        %s691 = scalar_lea.vmem %s336, 240 [#allocation2]
        %v692 = vld [vmem:[%s691] sm:$0xff]
        %v693 = vld [vmem:[%s691 + $0x8] sm:$0xff]
        %v694 = vld [vmem:[%s691 + $0x10] sm:$0xff]
        %v695 = vld [vmem:[%s691 + $0x18] sm:$0xff]
        %v696 = vld [vmem:[%s691 + $0x20] sm:$0xff]
        %v697 = vld [vmem:[%s691 + $0x28] sm:$0xff]
        %v698 = vld [vmem:[%s691 + $0x30] sm:$0xff]
        %v699 = vld [vmem:[%s691 + $0x38] sm:$0xff]
        %v700 = vld [vmem:[%s691 + $0x40] sm:$0xff]
        %v701 = vld [vmem:[%s691 + $0x48] sm:$0x33]
        %v712 = vunpack.c.l.b16 %v692
        %v713 = vunpack.c.h.b16 %v692
        %v714 = vunpack.c.l.b16 %v693
        %v715 = vunpack.c.h.b16 %v693
        %v716 = vunpack.c.l.b16 %v694
        %v717 = vunpack.c.h.b16 %v694
        %v718 = vunpack.c.l.b16 %v695
        %v719 = vunpack.c.h.b16 %v695
        %v720 = vunpack.c.l.b16 %v696
        %v721 = vunpack.c.h.b16 %v696
        %v722 = vunpack.c.l.b16 %v697
        %v723 = vunpack.c.h.b16 %v697
        %v724 = vunpack.c.l.b16 %v698
        %v725 = vunpack.c.h.b16 %v698
        %v726 = vunpack.c.l.b16 %v699
        %v727 = vunpack.c.h.b16 %v699
        %v728 = vunpack.c.l.b16 %v700
        %v729 = vunpack.c.h.b16 %v700
        %v730 = vunpack.c.l.b16 %v701
        %v731 = vunpack.c.h.b16 %v701
        %v732 = vpack.c.b16 %v714, %v712
        %v733 = vpack.c.b16 %v715, %v713
        %v734 = vpack.c.b16 %v718, %v716
        %v735 = vpack.c.b16 %v719, %v717
        %v736 = vpack.c.b16 %v722, %v720
        %v737 = vpack.c.b16 %v723, %v721
        %v738 = vpack.c.b16 %v726, %v724
        %v739 = vpack.c.b16 %v727, %v725
        %v740 = vpack.c.b16 %v730, %v728
        %v741 = vpack.c.b16 %v731, %v729
        %v751 = vand.u32 %v740, %v431
        %v754 = vand.u32 %v741, %v431
        %756 = vmatprep.subr.bf16.mxu0 %v733
        %757 = vmatpush1.bf16.msra.mxu0 %v732
        %758 = vmatprep.subr.bf16.mxu0 %v735
        %759 = vmatpush1.bf16.msra.mxu0 %v734
        %760 = vmatprep.subr.bf16.mxu0 %v737
        %761 = vmatpush1.bf16.msra.mxu0 %v736
        %762 = vmatprep.subr.bf16.mxu0 %v739
        %763 = vmatpush1.bf16.msra.mxu0 %v738
        %764 = vmatprep.subr.bf16.mxu0 %v754
        %765 = vmatpush1.bf16.msra.mxu0 %v751
        %766 = vmatprep.subr.bf16.mxu0 0
        %767 = vmatpush1.bf16.msra.mxu0 0
        %768 = vmatprep.subr.bf16.mxu0 0
        %769 = vmatpush1.bf16.msra.mxu0 0
        %770 = vmatprep.subr.bf16.mxu0 0
        %771 = vmatpush1.bf16.msra.mxu0 0
        %772 = vmatprep.subr.bf16.mxu0 0
        %773 = vmatpush1.bf16.msra.mxu0 0
        %774 = vmatprep.subr.bf16.mxu0 0
        %775 = vmatpush1.bf16.msra.mxu0 0
        %776 = vmatprep.subr.bf16.mxu0 0
        %777 = vmatpush1.bf16.msra.mxu0 0
        %778 = vmatprep.subr.bf16.mxu0 0
        %779 = vmatpush1.bf16.msra.mxu0 0
        %780 = vmatprep.subr.bf16.mxu0 0
        %781 = vmatpush1.bf16.msra.mxu0 0
        %782 = vmatprep.subr.bf16.mxu0 0
        %783 = vmatpush1.bf16.msra.mxu0 0
        %784 = vmatprep.subr.bf16.mxu0 0
        %785 = vmatpush1.bf16.msra.mxu0 0
        %786 = vmatprep.subr.bf16.mxu0 0
        %787 = vmatpush1.bf16.msra.mxu0 0
        %788 = vmatprep.mubr.bf16.mxu0 0
        %789 = vmatmul.mubr.bf16.gmra.mrb[0].mxu0 %v426
        %v790 = vpop.f32.mrb[0].mxu0
        %v791 = vadd.f32 0.0, %v790
        %v792 = vpop.f32.mrb[0].mxu0
        %v793 = vadd.f32 0.0, %v792
        %v794 = vpop.f32.mrb[0].mxu0
        %v795 = vpop.f32.mrb[0].mxu0
        %796 = vdwg.mxu0
        %v797 = vmax.f32 %v473, %v579
        %v798 = vmax.f32 %v475, %v581
        %v799 = vmax.f32 %v685, %v791
        %v800 = vmax.f32 %v687, %v793
        %v801 = vmax.f32 %v797, %v799
        %v802 = vmax.f32 %v798, %v800
        %v803 = vld [vmem:[%s2] sm:$0x3f]
        %805 = vset.pattern.permute.xlu0 0
        %806 = vperm.xlu0 %805, %v803
        %v807 = vpop.permute.xlu0 %806
        %v809 = vadd.f32 %v801, %v807
        %v810 = vadd.f32 %v802, %v807
        %v811 = vmax.f32 %v809, 0.0
        %v812 = vmax.f32 %v810, 0.0
        %v813 = vpack.c.bf16 %v811, %v811
        %v814 = vpack.c.bf16 %v812, %v812
        %v817 = vunpack.c.l.b16 %v813
        %v818 = vunpack.c.l.b16 %v814
        %v819 = vpack.c.b16 %v818, %v817
        %821 = vst [vmem:[%s362] sm:$0x77] %v819
        %s822 = smul.u32 2, %s14
        %p823 = scmp.lt.s32.totalorder %s822, 3
        %s824 = scalar_select %p823, %s822, 3
        %s825 = smul.addr %s824, 4
        %s826 = scalar_lea.vmem %s3, %s825
        // Predicated region
        $region71: #{net_forward.3} parent=65 // pred_check
          %p827 = pneg %p100
        $region72: #{net_forward.3} parent=65 // pred_check_branch
          %829 = sbr.rel (%p827) target = $region74
        $region73: #{net_forward.3} parent=65 // pred_region
          %s830 = smul.u32 2, %s14
        $region74: #{net_forward.3} parent=65 // pred_fallthru
          _
      $region66: #{net_forward.3} parent=5 // pred_fallthru
        _
      %p831 = scmp.le.s32.totalorder 2, %s9
      // Predicated region
      $region75: #{net_forward.3} parent=5 // pred_check
        %p832 = pneg %p831
      $region76: #{net_forward.3} parent=5 // pred_check_branch
        %834 = sbr.rel (%p832) target = $region78
      $region77: #{net_forward.3} parent=5 // pred_region
        %s835 = ssub.s32 %s9, 2
        // Predicated region
        $region79: #{net_forward.3} parent=77 // pred_check
          %p836 = pneg %p106
        $region80: #{net_forward.3} parent=77 // pred_check_branch
          %838 = sbr.rel (%p836) target = $region82
        $region81: #{net_forward.3} parent=77 // pred_region
          %s839 = smul.u32 2, %s15
          %p840 = scmp.lt.s32.totalorder %s839, 3
          %s841 = scalar_select %p840, %s839, 3
          %s842 = smul.addr %s841, 4
          %s843 = scalar_lea.vmem %s3, %s842
        $region82: #{net_forward.3} parent=77 // pred_fallthru
          _
      $region78: #{net_forward.3} parent=5 // pred_fallthru
        _
    $region6: #{net_forward.3} parent=1 // loop_footer
      %s13 = sadd.s32 1, %s9
    $region7: #{net_forward.3} parent=1 // loop_footer_branch
      %8 = sbr.rel target = $region3
    $region8: #{net_forward.3} parent=1 // loop_exit
      _

// kernel: net_forward.4
$region0: #{net_forward.4}
  #allocation0 [shape = 'u32[]', space=smem, size = 0x4, offset = 0x4, fixed_abs, tag = 'smem constant byte address 0x4 - core index']
  #allocation1 [shape = 'u32[144,128]{1,0:T(1,128)}', space=vmem, size = 0x12000, scoped, tag = 'internal scratch']
  %s0 = inlined_call_operand.vmem [shape: bf16[4,150,50], index: 0, kind: input, shape index: {}]
  %s1 = inlined_call_operand.vmem [shape: bf16[16,150], index: 1, kind: input, shape index: {}]
  %s2 = inlined_call_operand.vmem [shape: f32[16,1], index: 2, kind: input, shape index: {}]
  %s3 = inlined_call_operand.vmem [shape: bf16[16,50], index: 3, kind: output, shape index: {}]
  %s4 = sld [smem:[#allocation0]]
  $region22: #{net_forward.4} parent=0
    _
  %s6 = ssub.s32 1, %s4
  %s7 = scalar_select 0, %s6, %s4
  // Predicated region
  $region2: #{net_forward.4} parent=0 // pred_check
    _
  $region3: #{net_forward.4} parent=0 // pred_check_branch
    %9 = sbr.rel (0) target = $region5
  $region4: #{net_forward.4} parent=0 // pred_region
    _
  $region5: #{net_forward.4} parent=0 // pred_fallthru
    _
  // Predicated region
  $region6: #{net_forward.4} parent=0 // pred_check
    _
  $region7: #{net_forward.4} parent=0 // pred_check_branch
    %11 = sbr.rel (0) target = $region9
  $region8: #{net_forward.4} parent=0 // pred_region
    _
  $region9: #{net_forward.4} parent=0 // pred_fallthru
    _
  // Predicated region
  $region10: #{net_forward.4} parent=0 // pred_check
    _
  $region11: #{net_forward.4} parent=0 // pred_check_branch
    %13 = sbr.rel (0) target = $region13
  $region12: #{net_forward.4} parent=0 // pred_region
    _
  $region13: #{net_forward.4} parent=0 // pred_fallthru
    _
  %v15 = vld [vmem:[%s1] sm:$0xff]
  %v16 = vld [vmem:[%s1 + $0x8] sm:$0xff]
  %v17 = vld [vmem:[%s0] sm:$0xf]
  %v18 = vld [vmem:[%s0 + $0x4] sm:$0xf]
  %v19 = vld [vmem:[%s0 + $0x8] sm:$0xf]
  %v20 = vld [vmem:[%s0 + $0xc] sm:$0xf]
  %v21 = vld [vmem:[%s0 + $0x10] sm:$0xf]
  %v22 = vld [vmem:[%s0 + $0x14] sm:$0xf]
  %v23 = vld [vmem:[%s0 + $0x18] sm:$0xf]
  %v24 = vld [vmem:[%s0 + $0x1c] sm:$0xf]
  %v25 = vld [vmem:[%s0 + $0x20] sm:$0xf]
  %v26 = vld [vmem:[%s0 + $0x24] sm:$0xf]
  %v27 = vld [vmem:[%s0 + $0x28] sm:$0xf]
  %v28 = vld [vmem:[%s0 + $0x2c] sm:$0xf]
  %v29 = vld [vmem:[%s0 + $0x30] sm:$0xf]
  %v30 = vld [vmem:[%s0 + $0x34] sm:$0xf]
  %v31 = vld [vmem:[%s0 + $0x38] sm:$0xf]
  %v32 = vld [vmem:[%s0 + $0x3c] sm:$0xf]
  %v33 = vld [vmem:[%s0 + $0x40] sm:$0xf]
  %v34 = vld [vmem:[%s0 + $0x44] sm:$0xf]
  %v35 = vld [vmem:[%s0 + $0x48] sm:$0x7]
  %v38 = vunpack.c.l.b16 %v15
  %v39 = vunpack.c.h.b16 %v15
  %v40 = vunpack.c.l.b16 %v16
  %v41 = vunpack.c.h.b16 %v16
  %v42 = vpack.c.b16 %v40, %v38
  %v43 = vpack.c.b16 %v41, %v39
  %v64 = vunpack.c.l.b16 %v17
  %v65 = vunpack.c.l.b16 %v18
  %v66 = vunpack.c.l.b16 %v19
  %v67 = vunpack.c.l.b16 %v20
  %v68 = vunpack.c.l.b16 %v21
  %v69 = vunpack.c.l.b16 %v22
  %v70 = vunpack.c.l.b16 %v23
  %v71 = vunpack.c.l.b16 %v24
  %v72 = vunpack.c.l.b16 %v25
  %v73 = vunpack.c.l.b16 %v26
  %v74 = vunpack.c.l.b16 %v27
  %v75 = vunpack.c.l.b16 %v28
  %v76 = vunpack.c.l.b16 %v29
  %v77 = vunpack.c.l.b16 %v30
  %v78 = vunpack.c.l.b16 %v31
  %v79 = vunpack.c.l.b16 %v32
  %v80 = vunpack.c.l.b16 %v33
  %v81 = vunpack.c.l.b16 %v34
  %v82 = vunpack.c.l.b16 %v35
  %v83 = vpack.c.b16 %v65, %v64
  %v84 = vpack.c.b16 %v67, %v66
  %v85 = vpack.c.b16 %v69, %v68
  %v86 = vpack.c.b16 %v71, %v70
  %v87 = vpack.c.b16 %v73, %v72
  %v88 = vpack.c.b16 %v75, %v74
  %v89 = vpack.c.b16 %v77, %v76
  %v90 = vpack.c.b16 %v79, %v78
  %v91 = vpack.c.b16 %v81, %v80
  %v92 = vpack.c.b16 %v82, %v82
  %vm102 = vcmask 179200
  %v104 = vsel %vm102, %v43, 0
  %vm106 = vcmask 1042432
  %v108 = vsel %vm106, %v92, 0
  %110 = vmatprep.subr.bf16.mxu0 0
  %111 = vmatpush1.bf16.msra.mxu0 %v83
  %112 = vmatprep.subr.bf16.mxu0 0
  %113 = vmatpush1.bf16.msra.mxu0 %v84
  %114 = vmatprep.subr.bf16.mxu0 0
  %115 = vmatpush1.bf16.msra.mxu0 %v85
  %116 = vmatprep.subr.bf16.mxu0 0
  %117 = vmatpush1.bf16.msra.mxu0 %v86
  %118 = vmatprep.subr.bf16.mxu0 0
  %119 = vmatpush1.bf16.msra.mxu0 %v87
  %120 = vmatprep.subr.bf16.mxu0 0
  %121 = vmatpush1.bf16.msra.mxu0 %v88
  %122 = vmatprep.subr.bf16.mxu0 0
  %123 = vmatpush1.bf16.msra.mxu0 %v89
  %124 = vmatprep.subr.bf16.mxu0 0
  %125 = vmatpush1.bf16.msra.mxu0 %v90
  %126 = vmatprep.subr.bf16.mxu0 0
  %127 = vmatpush1.bf16.msra.mxu0 %v91
  %128 = vmatprep.subr.bf16.mxu0 0
  %129 = vmatpush1.bf16.msra.mxu0 %v108
  %130 = vmatprep.subr.bf16.mxu0 0
  %131 = vmatpush1.bf16.msra.mxu0 0
  %132 = vmatprep.subr.bf16.mxu0 0
  %133 = vmatpush1.bf16.msra.mxu0 0
  %134 = vmatprep.subr.bf16.mxu0 0
  %135 = vmatpush1.bf16.msra.mxu0 0
  %136 = vmatprep.subr.bf16.mxu0 0
  %137 = vmatpush1.bf16.msra.mxu0 0
  %138 = vmatprep.subr.bf16.mxu0 0
  %139 = vmatpush1.bf16.msra.mxu0 0
  %140 = vmatprep.subr.bf16.mxu0 0
  %141 = vmatpush1.bf16.msra.mxu0 0
  %142 = vmatprep.mubr.bf16.mxu0 %v104
  %143 = vmatmul.mubr.bf16.gmra.mrb[0].mxu0 %v42
  %v144 = vpop.f32.mrb[0].mxu0
  %v145 = vadd.f32 0.0, %v144
  %v146 = vpop.f32.mrb[0].mxu0
  %v147 = vpop.f32.mrb[0].mxu0
  %v148 = vadd.f32 0.0, %v147
  %v149 = vpop.f32.mrb[0].mxu0
  %150 = vdwg.mxu0
  %s151 = scalar_lea.vmem %s0, 76
  %v152 = vld [vmem:[%s151] sm:$0xf]
  %v153 = vld [vmem:[%s151 + $0x4] sm:$0xf]
  %v154 = vld [vmem:[%s151 + $0x8] sm:$0xf]
  %v155 = vld [vmem:[%s151 + $0xc] sm:$0xf]
  %v156 = vld [vmem:[%s151 + $0x10] sm:$0xf]
  %v157 = vld [vmem:[%s151 + $0x14] sm:$0xf]
  %v158 = vld [vmem:[%s151 + $0x18] sm:$0xf]
  %v159 = vld [vmem:[%s151 + $0x1c] sm:$0xf]
  %v160 = vld [vmem:[%s151 + $0x20] sm:$0xf]
  %v161 = vld [vmem:[%s151 + $0x24] sm:$0xf]
  %v162 = vld [vmem:[%s151 + $0x28] sm:$0xf]
  %v163 = vld [vmem:[%s151 + $0x2c] sm:$0xf]
  %v164 = vld [vmem:[%s151 + $0x30] sm:$0xf]
  %v165 = vld [vmem:[%s151 + $0x34] sm:$0xf]
  %v166 = vld [vmem:[%s151 + $0x38] sm:$0xf]
  %v167 = vld [vmem:[%s151 + $0x3c] sm:$0xf]
  %v168 = vld [vmem:[%s151 + $0x40] sm:$0xf]
  %v169 = vld [vmem:[%s151 + $0x44] sm:$0xf]
  %v170 = vld [vmem:[%s151 + $0x48] sm:$0x7]
  %v190 = vunpack.c.l.b16 %v152
  %v191 = vunpack.c.l.b16 %v153
  %v192 = vunpack.c.l.b16 %v154
  %v193 = vunpack.c.l.b16 %v155
  %v194 = vunpack.c.l.b16 %v156
  %v195 = vunpack.c.l.b16 %v157
  %v196 = vunpack.c.l.b16 %v158
  %v197 = vunpack.c.l.b16 %v159
  %v198 = vunpack.c.l.b16 %v160
  %v199 = vunpack.c.l.b16 %v161
  %v200 = vunpack.c.l.b16 %v162
  %v201 = vunpack.c.l.b16 %v163
  %v202 = vunpack.c.l.b16 %v164
  %v203 = vunpack.c.l.b16 %v165
  %v204 = vunpack.c.l.b16 %v166
  %v205 = vunpack.c.l.b16 %v167
  %v206 = vunpack.c.l.b16 %v168
  %v207 = vunpack.c.l.b16 %v169
  %v208 = vunpack.c.l.b16 %v170
  %v209 = vpack.c.b16 %v191, %v190
  %v210 = vpack.c.b16 %v193, %v192
  %v211 = vpack.c.b16 %v195, %v194
  %v212 = vpack.c.b16 %v197, %v196
  %v213 = vpack.c.b16 %v199, %v198
  %v214 = vpack.c.b16 %v201, %v200
  %v215 = vpack.c.b16 %v203, %v202
  %v216 = vpack.c.b16 %v205, %v204
  %v217 = vpack.c.b16 %v207, %v206
  %v218 = vpack.c.b16 %v208, %v208
  %v229 = vsel %vm106, %v218, 0
  %231 = vmatprep.subr.bf16.mxu0 0
  %232 = vmatpush1.bf16.msra.mxu0 %v209
  %233 = vmatprep.subr.bf16.mxu0 0
  %234 = vmatpush1.bf16.msra.mxu0 %v210
  %235 = vmatprep.subr.bf16.mxu0 0
  %236 = vmatpush1.bf16.msra.mxu0 %v211
  %237 = vmatprep.subr.bf16.mxu0 0
  %238 = vmatpush1.bf16.msra.mxu0 %v212
  %239 = vmatprep.subr.bf16.mxu0 0
  %240 = vmatpush1.bf16.msra.mxu0 %v213
  %241 = vmatprep.subr.bf16.mxu0 0
  %242 = vmatpush1.bf16.msra.mxu0 %v214
  %243 = vmatprep.subr.bf16.mxu0 0
  %244 = vmatpush1.bf16.msra.mxu0 %v215
  %245 = vmatprep.subr.bf16.mxu0 0
  %246 = vmatpush1.bf16.msra.mxu0 %v216
  %247 = vmatprep.subr.bf16.mxu0 0
  %248 = vmatpush1.bf16.msra.mxu0 %v217
  %249 = vmatprep.subr.bf16.mxu0 0
  %250 = vmatpush1.bf16.msra.mxu0 %v229
  %251 = vmatprep.subr.bf16.mxu0 0
  %252 = vmatpush1.bf16.msra.mxu0 0
  %253 = vmatprep.subr.bf16.mxu0 0
  %254 = vmatpush1.bf16.msra.mxu0 0
  %255 = vmatprep.subr.bf16.mxu0 0
  %256 = vmatpush1.bf16.msra.mxu0 0
  %257 = vmatprep.subr.bf16.mxu0 0
  %258 = vmatpush1.bf16.msra.mxu0 0
  %259 = vmatprep.subr.bf16.mxu0 0
  %260 = vmatpush1.bf16.msra.mxu0 0
  %261 = vmatprep.subr.bf16.mxu0 0
  %262 = vmatpush1.bf16.msra.mxu0 0
  %263 = vmatprep.mubr.bf16.mxu0 %v104
  %264 = vmatmul.mubr.bf16.gmra.mrb[0].mxu0 %v42
  %v265 = vpop.f32.mrb[0].mxu0
  %v266 = vadd.f32 0.0, %v265
  %v267 = vpop.f32.mrb[0].mxu0
  %v268 = vpop.f32.mrb[0].mxu0
  %v269 = vadd.f32 0.0, %v268
  %v270 = vpop.f32.mrb[0].mxu0
  %271 = vdwg.mxu0
  %s272 = scalar_lea.vmem %s0, 152
  %v273 = vld [vmem:[%s272] sm:$0xf]
  %v274 = vld [vmem:[%s272 + $0x4] sm:$0xf]
  %v275 = vld [vmem:[%s272 + $0x8] sm:$0xf]
  %v276 = vld [vmem:[%s272 + $0xc] sm:$0xf]
  %v277 = vld [vmem:[%s272 + $0x10] sm:$0xf]
  %v278 = vld [vmem:[%s272 + $0x14] sm:$0xf]
  %v279 = vld [vmem:[%s272 + $0x18] sm:$0xf]
  %v280 = vld [vmem:[%s272 + $0x1c] sm:$0xf]
  %v281 = vld [vmem:[%s272 + $0x20] sm:$0xf]
  %v282 = vld [vmem:[%s272 + $0x24] sm:$0xf]
  %v283 = vld [vmem:[%s272 + $0x28] sm:$0xf]
  %v284 = vld [vmem:[%s272 + $0x2c] sm:$0xf]
  %v285 = vld [vmem:[%s272 + $0x30] sm:$0xf]
  %v286 = vld [vmem:[%s272 + $0x34] sm:$0xf]
  %v287 = vld [vmem:[%s272 + $0x38] sm:$0xf]
  %v288 = vld [vmem:[%s272 + $0x3c] sm:$0xf]
  %v289 = vld [vmem:[%s272 + $0x40] sm:$0xf]
  %v290 = vld [vmem:[%s272 + $0x44] sm:$0xf]
  %v291 = vld [vmem:[%s272 + $0x48] sm:$0x7]
  %v311 = vunpack.c.l.b16 %v273
  %v312 = vunpack.c.l.b16 %v274
  %v313 = vunpack.c.l.b16 %v275
  %v314 = vunpack.c.l.b16 %v276
  %v315 = vunpack.c.l.b16 %v277
  %v316 = vunpack.c.l.b16 %v278
  %v317 = vunpack.c.l.b16 %v279
  %v318 = vunpack.c.l.b16 %v280
  %v319 = vunpack.c.l.b16 %v281
  %v320 = vunpack.c.l.b16 %v282
  %v321 = vunpack.c.l.b16 %v283
  %v322 = vunpack.c.l.b16 %v284
  %v323 = vunpack.c.l.b16 %v285
  %v324 = vunpack.c.l.b16 %v286
  %v325 = vunpack.c.l.b16 %v287
  %v326 = vunpack.c.l.b16 %v288
  %v327 = vunpack.c.l.b16 %v289
  %v328 = vunpack.c.l.b16 %v290
  %v329 = vunpack.c.l.b16 %v291
  %v330 = vpack.c.b16 %v312, %v311
  %v331 = vpack.c.b16 %v314, %v313
  %v332 = vpack.c.b16 %v316, %v315
  %v333 = vpack.c.b16 %v318, %v317
  %v334 = vpack.c.b16 %v320, %v319
  %v335 = vpack.c.b16 %v322, %v321
  %v336 = vpack.c.b16 %v324, %v323
  %v337 = vpack.c.b16 %v326, %v325
  %v338 = vpack.c.b16 %v328, %v327
  %v339 = vpack.c.b16 %v329, %v329
  %v350 = vsel %vm106, %v339, 0
  %352 = vmatprep.subr.bf16.mxu0 0
  %353 = vmatpush1.bf16.msra.mxu0 %v330
  %354 = vmatprep.subr.bf16.mxu0 0
  %355 = vmatpush1.bf16.msra.mxu0 %v331
  %356 = vmatprep.subr.bf16.mxu0 0
  %357 = vmatpush1.bf16.msra.mxu0 %v332
  %358 = vmatprep.subr.bf16.mxu0 0
  %359 = vmatpush1.bf16.msra.mxu0 %v333
  %360 = vmatprep.subr.bf16.mxu0 0
  %361 = vmatpush1.bf16.msra.mxu0 %v334
  %362 = vmatprep.subr.bf16.mxu0 0
  %363 = vmatpush1.bf16.msra.mxu0 %v335
  %364 = vmatprep.subr.bf16.mxu0 0
  %365 = vmatpush1.bf16.msra.mxu0 %v336
  %366 = vmatprep.subr.bf16.mxu0 0
  %367 = vmatpush1.bf16.msra.mxu0 %v337
  %368 = vmatprep.subr.bf16.mxu0 0
  %369 = vmatpush1.bf16.msra.mxu0 %v338
  %370 = vmatprep.subr.bf16.mxu0 0
  %371 = vmatpush1.bf16.msra.mxu0 %v350
  %372 = vmatprep.subr.bf16.mxu0 0
  %373 = vmatpush1.bf16.msra.mxu0 0
  %374 = vmatprep.subr.bf16.mxu0 0
  %375 = vmatpush1.bf16.msra.mxu0 0
  %376 = vmatprep.subr.bf16.mxu0 0
  %377 = vmatpush1.bf16.msra.mxu0 0
  %378 = vmatprep.subr.bf16.mxu0 0
  %379 = vmatpush1.bf16.msra.mxu0 0
  %380 = vmatprep.subr.bf16.mxu0 0
  %381 = vmatpush1.bf16.msra.mxu0 0
  %382 = vmatprep.subr.bf16.mxu0 0
  %383 = vmatpush1.bf16.msra.mxu0 0
  %384 = vmatprep.mubr.bf16.mxu0 %v104
  %385 = vmatmul.mubr.bf16.gmra.mrb[0].mxu0 %v42
  %v386 = vpop.f32.mrb[0].mxu0
  %v387 = vadd.f32 0.0, %v386
  %v388 = vpop.f32.mrb[0].mxu0
  %v389 = vpop.f32.mrb[0].mxu0
  %v390 = vadd.f32 0.0, %v389
  %v391 = vpop.f32.mrb[0].mxu0
  %392 = vdwg.mxu0
  %s393 = scalar_lea.vmem %s0, 228
  %v394 = vld [vmem:[%s393] sm:$0xf]
  %v395 = vld [vmem:[%s393 + $0x4] sm:$0xf]
  %v396 = vld [vmem:[%s393 + $0x8] sm:$0xf]
  %v397 = vld [vmem:[%s393 + $0xc] sm:$0xf]
  %v398 = vld [vmem:[%s393 + $0x10] sm:$0xf]
  %v399 = vld [vmem:[%s393 + $0x14] sm:$0xf]
  %v400 = vld [vmem:[%s393 + $0x18] sm:$0xf]
  %v401 = vld [vmem:[%s393 + $0x1c] sm:$0xf]
  %v402 = vld [vmem:[%s393 + $0x20] sm:$0xf]
  %v403 = vld [vmem:[%s393 + $0x24] sm:$0xf]
  %v404 = vld [vmem:[%s393 + $0x28] sm:$0xf]
  %v405 = vld [vmem:[%s393 + $0x2c] sm:$0xf]
  %v406 = vld [vmem:[%s393 + $0x30] sm:$0xf]
  %v407 = vld [vmem:[%s393 + $0x34] sm:$0xf]
  %v408 = vld [vmem:[%s393 + $0x38] sm:$0xf]
  %v409 = vld [vmem:[%s393 + $0x3c] sm:$0xf]
  %v410 = vld [vmem:[%s393 + $0x40] sm:$0xf]
  %v411 = vld [vmem:[%s393 + $0x44] sm:$0xf]
  %v412 = vld [vmem:[%s393 + $0x48] sm:$0x7]
  %v432 = vunpack.c.l.b16 %v394
  %v433 = vunpack.c.l.b16 %v395
  %v434 = vunpack.c.l.b16 %v396
  %v435 = vunpack.c.l.b16 %v397
  %v436 = vunpack.c.l.b16 %v398
  %v437 = vunpack.c.l.b16 %v399
  %v438 = vunpack.c.l.b16 %v400
  %v439 = vunpack.c.l.b16 %v401
  %v440 = vunpack.c.l.b16 %v402
  %v441 = vunpack.c.l.b16 %v403
  %v442 = vunpack.c.l.b16 %v404
  %v443 = vunpack.c.l.b16 %v405
  %v444 = vunpack.c.l.b16 %v406
  %v445 = vunpack.c.l.b16 %v407
  %v446 = vunpack.c.l.b16 %v408
  %v447 = vunpack.c.l.b16 %v409
  %v448 = vunpack.c.l.b16 %v410
  %v449 = vunpack.c.l.b16 %v411
  %v450 = vunpack.c.l.b16 %v412
  %v451 = vpack.c.b16 %v433, %v432
  %v452 = vpack.c.b16 %v435, %v434
  %v453 = vpack.c.b16 %v437, %v436
  %v454 = vpack.c.b16 %v439, %v438
  %v455 = vpack.c.b16 %v441, %v440
  %v456 = vpack.c.b16 %v443, %v442
  %v457 = vpack.c.b16 %v445, %v444
  %v458 = vpack.c.b16 %v447, %v446
  %v459 = vpack.c.b16 %v449, %v448
  %v460 = vpack.c.b16 %v450, %v450
  %v471 = vsel %vm106, %v460, 0
  %473 = vmatprep.subr.bf16.mxu0 0
  %474 = vmatpush1.bf16.msra.mxu0 %v451
  %475 = vmatprep.subr.bf16.mxu0 0
  %476 = vmatpush1.bf16.msra.mxu0 %v452
  %477 = vmatprep.subr.bf16.mxu0 0
  %478 = vmatpush1.bf16.msra.mxu0 %v453
  %479 = vmatprep.subr.bf16.mxu0 0
  %480 = vmatpush1.bf16.msra.mxu0 %v454
  %481 = vmatprep.subr.bf16.mxu0 0
  %482 = vmatpush1.bf16.msra.mxu0 %v455
  %483 = vmatprep.subr.bf16.mxu0 0
  %484 = vmatpush1.bf16.msra.mxu0 %v456
  %485 = vmatprep.subr.bf16.mxu0 0
  %486 = vmatpush1.bf16.msra.mxu0 %v457
  %487 = vmatprep.subr.bf16.mxu0 0
  %488 = vmatpush1.bf16.msra.mxu0 %v458
  %489 = vmatprep.subr.bf16.mxu0 0
  %490 = vmatpush1.bf16.msra.mxu0 %v459
  %491 = vmatprep.subr.bf16.mxu0 0
  %492 = vmatpush1.bf16.msra.mxu0 %v471
  %493 = vmatprep.subr.bf16.mxu0 0
  %494 = vmatpush1.bf16.msra.mxu0 0
  %495 = vmatprep.subr.bf16.mxu0 0
  %496 = vmatpush1.bf16.msra.mxu0 0
  %497 = vmatprep.subr.bf16.mxu0 0
  %498 = vmatpush1.bf16.msra.mxu0 0
  %499 = vmatprep.subr.bf16.mxu0 0
  %500 = vmatpush1.bf16.msra.mxu0 0
  %501 = vmatprep.subr.bf16.mxu0 0
  %502 = vmatpush1.bf16.msra.mxu0 0
  %503 = vmatprep.subr.bf16.mxu0 0
  %504 = vmatpush1.bf16.msra.mxu0 0
  %505 = vmatprep.mubr.bf16.mxu0 %v104
  %506 = vmatmul.mubr.bf16.gmra.mrb[0].mxu0 %v42
  %v507 = vpop.f32.mrb[0].mxu0
  %v508 = vadd.f32 0.0, %v507
  %v509 = vpop.f32.mrb[0].mxu0
  %v510 = vpop.f32.mrb[0].mxu0
  %v511 = vadd.f32 0.0, %v510
  %v512 = vpop.f32.mrb[0].mxu0
  %513 = vdwg.mxu0
  %v514 = vmax.f32 %v145, %v266
  %v515 = vmax.f32 %v148, %v269
  %v516 = vmax.f32 %v387, %v508
  %v517 = vmax.f32 %v390, %v511
  %v518 = vmax.f32 %v514, %v516
  %v519 = vmax.f32 %v515, %v517
  %v520 = vld [vmem:[%s2] sm:$0xff]
  %v521 = vld [vmem:[%s2 + $0x8] sm:$0xff]
  %523 = vset.pattern.permute.xlu0 0
  %524 = vperm.xlu0 %523, %v520
  %v525 = vpop.permute.xlu0 %524
  %528 = vset.pattern.permute.xlu0 0
  %529 = vperm.xlu0 %528, %v521
  %v530 = vpop.permute.xlu0 %529
  %v532 = vadd.f32 %v518, %v525
  %v533 = vadd.f32 %v519, %v530
  %v534 = vmax.f32 %v532, 0.0
  %v535 = vmax.f32 %v533, 0.0
  %v536 = vpack.c.bf16 %v535, %v534
  %v538 = vunpack.c.l.b16 %v536
  %v539 = vunpack.c.h.b16 %v536
  %v540 = vpack.c.b16 %v538, %v538
  %v541 = vpack.c.b16 %v539, %v539
  %vm544 = vcmask 404480
  %545 = vst.msk [vmem:[%s3] sm:$0xf] %vm544, %v540
  %546 = vst.msk [vmem:[%s3 + $0x4] sm:$0xf] %vm544, %v541
  // Predicated region
  $region14: #{net_forward.4} parent=0 // pred_check
    _
  $region15: #{net_forward.4} parent=0 // pred_check_branch
    %548 = sbr.rel (0) target = $region17
  $region16: #{net_forward.4} parent=0 // pred_region
    _
  $region17: #{net_forward.4} parent=0 // pred_fallthru
    _
  // Predicated region
  $region18: #{net_forward.4} parent=0 // pred_check
    _
  $region19: #{net_forward.4} parent=0 // pred_check_branch
    %550 = sbr.rel (0) target = $region21
  $region20: #{net_forward.4} parent=0 // pred_region
    _
  $region21: #{net_forward.4} parent=0 // pred_fallthru
    _

// kernel: net_forward.5
$region0: #{net_forward.5}
  #allocation0 [shape = 'u32[]', space=smem, size = 0x4, offset = 0x4, fixed_abs, tag = 'smem constant byte address 0x4 - core index']
  #allocation1 [shape = 'u32[144,128]{1,0:T(1,128)}', space=vmem, size = 0x12000, scoped, tag = 'internal scratch']
  %s0 = inlined_call_operand.vmem [shape: bf16[2,400], index: 0, kind: input, shape index: {}]
  %s1 = inlined_call_operand.vmem [shape: bf16[400,120], index: 1, kind: input, shape index: {}]
  %s2 = inlined_call_operand.vmem [shape: f32[1,120], index: 2, kind: input, shape index: {}]
  %s3 = inlined_call_operand.vmem [shape: bf16[120,84], index: 3, kind: input, shape index: {}]
  %s4 = inlined_call_operand.vmem [shape: f32[1,84], index: 4, kind: input, shape index: {}]
  %s5 = inlined_call_operand.vmem [shape: bf16[84,10], index: 5, kind: input, shape index: {}]
  %s6 = inlined_call_operand.vmem [shape: f32[1,10], index: 6, kind: input, shape index: {}]
  %s7 = inlined_call_operand.hbm [shape: f32[2,10], index: 7, kind: output, shape index: {}]
  %s8 = sld [smem:[#allocation0]]
  $region38: #{net_forward.5} parent=0
    _
  %s10 = ssub.s32 1, %s8
  %s11 = scalar_select 0, %s10, %s8
  $region1: #{net_forward.5} parent=0
    #allocation2 [shape = 'u8[1024]{0}', space=vmem, size = 0x400, scoped, tag = 'output window, operand 0, single buffered']
    #allocation3 [shape = 's32[1]{0}', space=sflag, size = 0x4, scoped, tag = 'scoped memory for net_forward.5']
    %12 = vsyncpa [#allocation3], 0
    // Predicated region
    $region2: #{net_forward.5} parent=1 // pred_check
      _
    $region3: #{net_forward.5} parent=1 // pred_check_branch
      %14 = sbr.rel (0) target = $region5
    $region4: #{net_forward.5} parent=1 // pred_region
      _
    $region5: #{net_forward.5} parent=1 // pred_fallthru
      _
    // Predicated region
    $region6: #{net_forward.5} parent=1 // pred_check
      _
    $region7: #{net_forward.5} parent=1 // pred_check_branch
      %16 = sbr.rel (0) target = $region9
    $region8: #{net_forward.5} parent=1 // pred_region
      _
    $region9: #{net_forward.5} parent=1 // pred_fallthru
      _
    // Predicated region
    $region10: #{net_forward.5} parent=1 // pred_check
      _
    $region11: #{net_forward.5} parent=1 // pred_check_branch
      %18 = sbr.rel (0) target = $region13
    $region12: #{net_forward.5} parent=1 // pred_region
      _
    $region13: #{net_forward.5} parent=1 // pred_fallthru
      _
    // Predicated region
    $region14: #{net_forward.5} parent=1 // pred_check
      _
    $region15: #{net_forward.5} parent=1 // pred_check_branch
      %20 = sbr.rel (0) target = $region17
    $region16: #{net_forward.5} parent=1 // pred_region
      _
    $region17: #{net_forward.5} parent=1 // pred_fallthru
      _
    // Predicated region
    $region18: #{net_forward.5} parent=1 // pred_check
      _
    $region19: #{net_forward.5} parent=1 // pred_check_branch
      %22 = sbr.rel (0) target = $region21
    $region20: #{net_forward.5} parent=1 // pred_region
      _
    $region21: #{net_forward.5} parent=1 // pred_fallthru
      _
    // Predicated region
    $region22: #{net_forward.5} parent=1 // pred_check
      _
    $region23: #{net_forward.5} parent=1 // pred_check_branch
      %24 = sbr.rel (0) target = $region25
    $region24: #{net_forward.5} parent=1 // pred_region
      _
    $region25: #{net_forward.5} parent=1 // pred_fallthru
      _
    // Predicated region
    $region26: #{net_forward.5} parent=1 // pred_check
      _
    $region27: #{net_forward.5} parent=1 // pred_check_branch
      %26 = sbr.rel (0) target = $region29
    $region28: #{net_forward.5} parent=1 // pred_region
      _
    $region29: #{net_forward.5} parent=1 // pred_fallthru
      _
    %v28 = vld [vmem:[%s0] sm:$0xf]
    %v29 = vld [vmem:[%s1] sm:$0xf]
    %v30 = vld [vmem:[%s1 + $0x4] sm:$0xf]
    %v31 = vld [vmem:[%s1 + $0x8] sm:$0xf]
    %v32 = vld [vmem:[%s1 + $0xc] sm:$0xf]
    %v33 = vld [vmem:[%s1 + $0x10] sm:$0xf]
    %v34 = vld [vmem:[%s1 + $0x14] sm:$0xf]
    %v35 = vld [vmem:[%s1 + $0x18] sm:$0xf]
    %v36 = vld [vmem:[%s1 + $0x1c] sm:$0xf]
    %v37 = vld [vmem:[%s1 + $0x20] sm:$0xf]
    %v38 = vld [vmem:[%s1 + $0x24] sm:$0xf]
    %v39 = vld [vmem:[%s1 + $0x28] sm:$0xf]
    %v40 = vld [vmem:[%s1 + $0x2c] sm:$0xf]
    %v41 = vld [vmem:[%s1 + $0x30] sm:$0xf]
    %v42 = vld [vmem:[%s1 + $0x34] sm:$0xf]
    %v43 = vld [vmem:[%s1 + $0x38] sm:$0xf]
    %v44 = vld [vmem:[%s1 + $0x3c] sm:$0xf]
    %v45 = vld [vmem:[%s1 + $0x40] sm:$0xf]
    %v46 = vld [vmem:[%s1 + $0x44] sm:$0xf]
    %v47 = vld [vmem:[%s1 + $0x48] sm:$0xf]
    %v48 = vld [vmem:[%s1 + $0x4c] sm:$0xf]
    %v49 = vld [vmem:[%s1 + $0x50] sm:$0xf]
    %v50 = vld [vmem:[%s1 + $0x54] sm:$0xf]
    %v51 = vld [vmem:[%s1 + $0x58] sm:$0xf]
    %v52 = vld [vmem:[%s1 + $0x5c] sm:$0xf]
    %v53 = vld [vmem:[%s1 + $0x60] sm:$0xf]
    %v54 = vld [vmem:[%s1 + $0x64] sm:$0xf]
    %v55 = vld [vmem:[%s1 + $0x68] sm:$0xf]
    %v56 = vld [vmem:[%s1 + $0x6c] sm:$0xf]
    %v57 = vld [vmem:[%s1 + $0x70] sm:$0xf]
    %v58 = vld [vmem:[%s1 + $0x74] sm:$0xf]
    %v59 = vld [vmem:[%s1 + $0x78] sm:$0xf]
    %v60 = vld [vmem:[%s1 + $0x7c] sm:$0xf]
    %v61 = vld [vmem:[%s1 + $0x80] sm:$0xf]
    %v62 = vld [vmem:[%s1 + $0x84] sm:$0xf]
    %v63 = vld [vmem:[%s1 + $0x88] sm:$0xf]
    %v64 = vld [vmem:[%s1 + $0x8c] sm:$0xf]
    %v65 = vld [vmem:[%s1 + $0x90] sm:$0xf]
    %v66 = vld [vmem:[%s1 + $0x94] sm:$0xf]
    %v67 = vld [vmem:[%s1 + $0x98] sm:$0xf]
    %v68 = vld [vmem:[%s1 + $0x9c] sm:$0xf]
    %v69 = vld [vmem:[%s1 + $0xa0] sm:$0xf]
    %v70 = vld [vmem:[%s1 + $0xa4] sm:$0xf]
    %v71 = vld [vmem:[%s1 + $0xa8] sm:$0xf]
    %v72 = vld [vmem:[%s1 + $0xac] sm:$0xf]
    %v73 = vld [vmem:[%s1 + $0xb0] sm:$0xf]
    %v74 = vld [vmem:[%s1 + $0xb4] sm:$0xf]
    %v75 = vld [vmem:[%s1 + $0xb8] sm:$0xf]
    %v76 = vld [vmem:[%s1 + $0xbc] sm:$0xf]
    %v77 = vld [vmem:[%s1 + $0xc0] sm:$0xf]
    %v78 = vld [vmem:[%s1 + $0xc4] sm:$0xf]
    %v79 = vld [vmem:[%s2] sm:$0x1]
    %v81 = vlaneseq
    %v82 = vshrl.u32 %v81, 7
    %v83 = vsub.s32 0, %v82
    %v84 = vrot.slane %v79, %v83
    %v88 = vunpack.c.l.s4 1966171168
    %v89 = vunpack.c.0.s8 %v88
    %v90 = vlaneseq
    %v91 = vshrl.u32 %v90, 7
    %v92 = vsub.s32 %v89, %v91
    %v93 = vrot.slane %v28, %v92
    %v94 = vcombine.high %v93, %v93
    %v96 = vunpack.c.l.s4 1966171168
    %v97 = vunpack.c.0.s8 %v96
    %v98 = vlaneseq
    %v99 = vshrl.u32 %v98, 7
    %v100 = vsub.s32 %v97, %v99
    %v101 = vrot.slane %v93, %v100
    %v103 = vunpack.c.l.s4 1966171168
    %v104 = vunpack.c.0.s8 %v103
    %v105 = vlaneseq
    %v106 = vshrl.u32 %v105, 7
    %v107 = vsub.s32 %v104, %v106
    %v108 = vrot.slane %v94, %v107
    %v109 = vcombine.high %v101, %v101
    %v110 = vcombine.high %v108, %v108
    %v164 = vunpack.c.l.b16 %v29
    %v165 = vunpack.c.l.b16 %v30
    %v166 = vunpack.c.l.b16 %v31
    %v167 = vunpack.c.l.b16 %v32
    %v168 = vunpack.c.l.b16 %v33
    %v169 = vunpack.c.l.b16 %v34
    %v170 = vunpack.c.l.b16 %v35
    %v171 = vunpack.c.l.b16 %v36
    %v172 = vunpack.c.l.b16 %v37
    %v173 = vunpack.c.l.b16 %v38
    %v174 = vunpack.c.l.b16 %v39
    %v175 = vunpack.c.l.b16 %v40
    %v176 = vunpack.c.l.b16 %v41
    %v177 = vunpack.c.l.b16 %v42
    %v178 = vunpack.c.l.b16 %v43
    %v179 = vunpack.c.l.b16 %v44
    %v180 = vunpack.c.l.b16 %v45
    %v181 = vunpack.c.l.b16 %v46
    %v182 = vunpack.c.l.b16 %v47
    %v183 = vunpack.c.l.b16 %v48
    %v184 = vunpack.c.l.b16 %v49
    %v185 = vunpack.c.l.b16 %v50
    %v186 = vunpack.c.l.b16 %v51
    %v187 = vunpack.c.l.b16 %v52
    %v188 = vunpack.c.l.b16 %v53
    %v189 = vunpack.c.l.b16 %v54
    %v190 = vunpack.c.l.b16 %v55
    %v191 = vunpack.c.l.b16 %v56
    %v192 = vunpack.c.l.b16 %v57
    %v193 = vunpack.c.l.b16 %v58
    %v194 = vunpack.c.l.b16 %v59
    %v195 = vunpack.c.l.b16 %v60
    %v196 = vunpack.c.l.b16 %v61
    %v197 = vunpack.c.l.b16 %v62
    %v198 = vunpack.c.l.b16 %v63
    %v199 = vunpack.c.l.b16 %v64
    %v200 = vunpack.c.l.b16 %v65
    %v201 = vunpack.c.l.b16 %v66
    %v202 = vunpack.c.l.b16 %v67
    %v203 = vunpack.c.l.b16 %v68
    %v204 = vunpack.c.l.b16 %v69
    %v205 = vunpack.c.l.b16 %v70
    %v206 = vunpack.c.l.b16 %v71
    %v207 = vunpack.c.l.b16 %v72
    %v208 = vunpack.c.l.b16 %v73
    %v209 = vunpack.c.l.b16 %v74
    %v210 = vunpack.c.l.b16 %v75
    %v211 = vunpack.c.l.b16 %v76
    %v212 = vunpack.c.l.b16 %v77
    %v213 = vunpack.c.l.b16 %v78
    %v214 = vpack.c.b16 %v165, %v164
    %v215 = vpack.c.b16 %v167, %v166
    %v216 = vpack.c.b16 %v169, %v168
    %v217 = vpack.c.b16 %v171, %v170
    %v218 = vpack.c.b16 %v173, %v172
    %v219 = vpack.c.b16 %v175, %v174
    %v220 = vpack.c.b16 %v177, %v176
    %v221 = vpack.c.b16 %v179, %v178
    %v222 = vpack.c.b16 %v181, %v180
    %v223 = vpack.c.b16 %v183, %v182
    %v224 = vpack.c.b16 %v185, %v184
    %v225 = vpack.c.b16 %v187, %v186
    %v226 = vpack.c.b16 %v189, %v188
    %v227 = vpack.c.b16 %v191, %v190
    %v228 = vpack.c.b16 %v193, %v192
    %v229 = vpack.c.b16 %v195, %v194
    %v230 = vpack.c.b16 %v197, %v196
    %v231 = vpack.c.b16 %v199, %v198
    %v232 = vpack.c.b16 %v201, %v200
    %v233 = vpack.c.b16 %v203, %v202
    %v234 = vpack.c.b16 %v205, %v204
    %v235 = vpack.c.b16 %v207, %v206
    %v236 = vpack.c.b16 %v209, %v208
    %v237 = vpack.c.b16 %v211, %v210
    %v238 = vpack.c.b16 %v213, %v212
    %vm264 = vcmask 130048
    %v266 = vsel %vm264, %v110, 0
    %268 = vmatprep.subr.bf16.mxu0 0
    %269 = vmatpush1.bf16.msra.mxu0 %v214
    %270 = vmatprep.subr.bf16.mxu0 0
    %271 = vmatpush1.bf16.msra.mxu0 %v215
    %272 = vmatprep.subr.bf16.mxu0 0
    %273 = vmatpush1.bf16.msra.mxu0 %v216
    %274 = vmatprep.subr.bf16.mxu0 0
    %275 = vmatpush1.bf16.msra.mxu0 %v217
    %276 = vmatprep.subr.bf16.mxu0 0
    %277 = vmatpush1.bf16.msra.mxu0 %v218
    %278 = vmatprep.subr.bf16.mxu0 0
    %279 = vmatpush1.bf16.msra.mxu0 %v219
    %280 = vmatprep.subr.bf16.mxu0 0
    %281 = vmatpush1.bf16.msra.mxu0 %v220
    %282 = vmatprep.subr.bf16.mxu0 0
    %283 = vmatpush1.bf16.msra.mxu0 %v221
    %284 = vmatprep.subr.bf16.mxu0 0
    %285 = vmatpush1.bf16.msra.mxu0 %v222
    %286 = vmatprep.subr.bf16.mxu0 0
    %287 = vmatpush1.bf16.msra.mxu0 %v223
    %288 = vmatprep.subr.bf16.mxu0 0
    %289 = vmatpush1.bf16.msra.mxu0 %v224
    %290 = vmatprep.subr.bf16.mxu0 0
    %291 = vmatpush1.bf16.msra.mxu0 %v225
    %292 = vmatprep.subr.bf16.mxu0 0
    %293 = vmatpush1.bf16.msra.mxu0 %v226
    %294 = vmatprep.subr.bf16.mxu0 0
    %295 = vmatpush1.bf16.msra.mxu0 %v227
    %296 = vmatprep.subr.bf16.mxu0 0
    %297 = vmatpush1.bf16.msra.mxu0 %v228
    %298 = vmatprep.subr.bf16.mxu0 0
    %299 = vmatpush1.bf16.msra.mxu0 %v229
    %300 = vmatprep.mubr.bf16.mxu0 %v108
    %301 = vmatmul.mubr.bf16.gmra.mrb[0].mxu0 %v101
    %v302 = vpop.f32.mrb[0].mxu0
    %v303 = vadd.f32 %v84, %v302
    %v304 = vpop.f32.mrb[0].mxu0
    %v305 = vpop.f32.mrb[0].mxu0
    %v306 = vpop.f32.mrb[0].mxu0
    %307 = vdwg.mxu0
    %308 = vmatprep.subr.bf16.mxu0 0
    %309 = vmatpush1.bf16.msra.mxu0 %v230
    %310 = vmatprep.subr.bf16.mxu0 0
    %311 = vmatpush1.bf16.msra.mxu0 %v231
    %312 = vmatprep.subr.bf16.mxu0 0
    %313 = vmatpush1.bf16.msra.mxu0 %v232
    %314 = vmatprep.subr.bf16.mxu0 0
    %315 = vmatpush1.bf16.msra.mxu0 %v233
    %316 = vmatprep.subr.bf16.mxu0 0
    %317 = vmatpush1.bf16.msra.mxu0 %v234
    %318 = vmatprep.subr.bf16.mxu0 0
    %319 = vmatpush1.bf16.msra.mxu0 %v235
    %320 = vmatprep.subr.bf16.mxu0 0
    %321 = vmatpush1.bf16.msra.mxu0 %v236
    %322 = vmatprep.subr.bf16.mxu0 0
    %323 = vmatpush1.bf16.msra.mxu0 %v237
    %324 = vmatprep.subr.bf16.mxu0 0
    %325 = vmatpush1.bf16.msra.mxu0 %v238
    %326 = vmatprep.subr.bf16.mxu0 0
    %327 = vmatpush1.bf16.msra.mxu0 0
    %328 = vmatprep.subr.bf16.mxu0 0
    %329 = vmatpush1.bf16.msra.mxu0 0
    %330 = vmatprep.subr.bf16.mxu0 0
    %331 = vmatpush1.bf16.msra.mxu0 0
    %332 = vmatprep.subr.bf16.mxu0 0
    %333 = vmatpush1.bf16.msra.mxu0 0
    %334 = vmatprep.subr.bf16.mxu0 0
    %335 = vmatpush1.bf16.msra.mxu0 0
    %336 = vmatprep.subr.bf16.mxu0 0
    %337 = vmatpush1.bf16.msra.mxu0 0
    %338 = vmatprep.subr.bf16.mxu0 0
    %339 = vmatpush1.bf16.msra.mxu0 0
    %340 = vmatprep.mubr.bf16.mxu0 %v266
    %341 = vmatmul.mubr.bf16.gmra.mrb[0].mxu0 %v109
    %v342 = vpop.f32.mrb[0].mxu0
    %v343 = vadd.f32 %v303, %v342
    %v344 = vpop.f32.mrb[0].mxu0
    %v345 = vpop.f32.mrb[0].mxu0
    %v346 = vpop.f32.mrb[0].mxu0
    %347 = vdwg.mxu0
    %v348 = vmax.f32 %v343, 0.0
    %v349 = vpack.c.bf16 %v348, %v348
    %v350 = vld [vmem:[%s3] sm:$0xf]
    %v351 = vld [vmem:[%s3 + $0x4] sm:$0xf]
    %v352 = vld [vmem:[%s3 + $0x8] sm:$0xf]
    %v353 = vld [vmem:[%s3 + $0xc] sm:$0xf]
    %v354 = vld [vmem:[%s3 + $0x10] sm:$0xf]
    %v355 = vld [vmem:[%s3 + $0x14] sm:$0xf]
    %v356 = vld [vmem:[%s3 + $0x18] sm:$0xf]
    %v357 = vld [vmem:[%s3 + $0x1c] sm:$0xf]
    %v358 = vld [vmem:[%s3 + $0x20] sm:$0xf]
    %v359 = vld [vmem:[%s3 + $0x24] sm:$0xf]
    %v360 = vld [vmem:[%s3 + $0x28] sm:$0xf]
    %v361 = vld [vmem:[%s3 + $0x2c] sm:$0xf]
    %v362 = vld [vmem:[%s3 + $0x30] sm:$0xf]
    %v363 = vld [vmem:[%s3 + $0x34] sm:$0xf]
    %v364 = vld [vmem:[%s3 + $0x38] sm:$0xf]
    %v365 = vld [vmem:[%s4] sm:$0x1]
    %v367 = vlaneseq
    %v368 = vshrl.u32 %v367, 7
    %v369 = vsub.s32 0, %v368
    %v370 = vrot.slane %v365, %v369
    %v387 = vunpack.c.l.b16 %v350
    %v388 = vunpack.c.l.b16 %v351
    %v389 = vunpack.c.l.b16 %v352
    %v390 = vunpack.c.l.b16 %v353
    %v391 = vunpack.c.l.b16 %v354
    %v392 = vunpack.c.l.b16 %v355
    %v393 = vunpack.c.l.b16 %v356
    %v394 = vunpack.c.l.b16 %v357
    %v395 = vunpack.c.l.b16 %v358
    %v396 = vunpack.c.l.b16 %v359
    %v397 = vunpack.c.l.b16 %v360
    %v398 = vunpack.c.l.b16 %v361
    %v399 = vunpack.c.l.b16 %v362
    %v400 = vunpack.c.l.b16 %v363
    %v401 = vunpack.c.l.b16 %v364
    %v402 = vpack.c.b16 %v388, %v387
    %v403 = vpack.c.b16 %v390, %v389
    %v404 = vpack.c.b16 %v392, %v391
    %v405 = vpack.c.b16 %v394, %v393
    %v406 = vpack.c.b16 %v396, %v395
    %v407 = vpack.c.b16 %v398, %v397
    %v408 = vpack.c.b16 %v400, %v399
    %v409 = vpack.c.b16 %v401, %v401
    %vm417 = vcmask 982016
    %v419 = vsel %vm417, %v349, 0
    %vm421 = vcmask 1043456
    %v423 = vsel %vm421, %v409, 0
    %425 = vmatprep.subr.bf16.mxu0 0
    %426 = vmatpush1.bf16.msra.mxu0 %v402
    %427 = vmatprep.subr.bf16.mxu0 0
    %428 = vmatpush1.bf16.msra.mxu0 %v403
    %429 = vmatprep.subr.bf16.mxu0 0
    %430 = vmatpush1.bf16.msra.mxu0 %v404
    %431 = vmatprep.subr.bf16.mxu0 0
    %432 = vmatpush1.bf16.msra.mxu0 %v405
    %433 = vmatprep.subr.bf16.mxu0 0
    %434 = vmatpush1.bf16.msra.mxu0 %v406
    %435 = vmatprep.subr.bf16.mxu0 0
    %436 = vmatpush1.bf16.msra.mxu0 %v407
    %437 = vmatprep.subr.bf16.mxu0 0
    %438 = vmatpush1.bf16.msra.mxu0 %v408
    %439 = vmatprep.subr.bf16.mxu0 0
    %440 = vmatpush1.bf16.msra.mxu0 %v423
    %441 = vmatprep.subr.bf16.mxu0 0
    %442 = vmatpush1.bf16.msra.mxu0 0
    %443 = vmatprep.subr.bf16.mxu0 0
    %444 = vmatpush1.bf16.msra.mxu0 0
    %445 = vmatprep.subr.bf16.mxu0 0
    %446 = vmatpush1.bf16.msra.mxu0 0
    %447 = vmatprep.subr.bf16.mxu0 0
    %448 = vmatpush1.bf16.msra.mxu0 0
    %449 = vmatprep.subr.bf16.mxu0 0
    %450 = vmatpush1.bf16.msra.mxu0 0
    %451 = vmatprep.subr.bf16.mxu0 0
    %452 = vmatpush1.bf16.msra.mxu0 0
    %453 = vmatprep.subr.bf16.mxu0 0
    %454 = vmatpush1.bf16.msra.mxu0 0
    %455 = vmatprep.subr.bf16.mxu0 0
    %456 = vmatpush1.bf16.msra.mxu0 0
    %457 = vmatprep.mubr.bf16.mxu0 0
    %458 = vmatmul.mubr.bf16.gmra.mrb[0].mxu0 %v419
    %v459 = vpop.f32.mrb[0].mxu0
    %v460 = vadd.f32 %v370, %v459
    %v461 = vpop.f32.mrb[0].mxu0
    %v462 = vpop.f32.mrb[0].mxu0
    %v463 = vpop.f32.mrb[0].mxu0
    %464 = vdwg.mxu0
    %v465 = vmax.f32 %v460, 0.0
    %v466 = vpack.c.bf16 %v465, %v465
    %v467 = vld [vmem:[%s5] sm:$0xf]
    %v468 = vld [vmem:[%s5 + $0x4] sm:$0xf]
    %v469 = vld [vmem:[%s5 + $0x8] sm:$0xf]
    %v470 = vld [vmem:[%s5 + $0xc] sm:$0xf]
    %v471 = vld [vmem:[%s5 + $0x10] sm:$0xf]
    %v472 = vld [vmem:[%s5 + $0x14] sm:$0xf]
    %v473 = vld [vmem:[%s5 + $0x18] sm:$0xf]
    %v474 = vld [vmem:[%s5 + $0x1c] sm:$0xf]
    %v475 = vld [vmem:[%s5 + $0x20] sm:$0xf]
    %v476 = vld [vmem:[%s5 + $0x24] sm:$0xf]
    %v477 = vld [vmem:[%s5 + $0x28] sm:$0x3]
    %v478 = vld [vmem:[%s6] sm:$0x1]
    %v480 = vlaneseq
    %v481 = vshrl.u32 %v480, 7
    %v482 = vsub.s32 0, %v481
    %v483 = vrot.slane %v478, %v482
    %v496 = vunpack.c.l.b16 %v467
    %v497 = vunpack.c.l.b16 %v468
    %v498 = vunpack.c.l.b16 %v469
    %v499 = vunpack.c.l.b16 %v470
    %v500 = vunpack.c.l.b16 %v471
    %v501 = vunpack.c.l.b16 %v472
    %v502 = vunpack.c.l.b16 %v473
    %v503 = vunpack.c.l.b16 %v474
    %v504 = vunpack.c.l.b16 %v475
    %v505 = vunpack.c.l.b16 %v476
    %v506 = vunpack.c.l.b16 %v477
    %v507 = vpack.c.b16 %v497, %v496
    %v508 = vpack.c.b16 %v499, %v498
    %v509 = vpack.c.b16 %v501, %v500
    %v510 = vpack.c.b16 %v503, %v502
    %v511 = vpack.c.b16 %v505, %v504
    %v512 = vpack.c.b16 %v506, %v506
    %vm518 = vcmask 687104
    %v520 = vsel %vm518, %v466, 0
    %vm522 = vcmask 1041408
    %v524 = vsel %vm522, %v512, 0
    %526 = vmatprep.subr.bf16.mxu0 0
    %527 = vmatpush1.bf16.msra.mxu0 %v507
    %528 = vmatprep.subr.bf16.mxu0 0
    %529 = vmatpush1.bf16.msra.mxu0 %v508
    %530 = vmatprep.subr.bf16.mxu0 0
    %531 = vmatpush1.bf16.msra.mxu0 %v509
    %532 = vmatprep.subr.bf16.mxu0 0
    %533 = vmatpush1.bf16.msra.mxu0 %v510
    %534 = vmatprep.subr.bf16.mxu0 0
    %535 = vmatpush1.bf16.msra.mxu0 %v511
    %536 = vmatprep.subr.bf16.mxu0 0
    %537 = vmatpush1.bf16.msra.mxu0 %v524
    %538 = vmatprep.subr.bf16.mxu0 0
    %539 = vmatpush1.bf16.msra.mxu0 0
    %540 = vmatprep.subr.bf16.mxu0 0
    %541 = vmatpush1.bf16.msra.mxu0 0
    %542 = vmatprep.subr.bf16.mxu0 0
    %543 = vmatpush1.bf16.msra.mxu0 0
    %544 = vmatprep.subr.bf16.mxu0 0
    %545 = vmatpush1.bf16.msra.mxu0 0
    %546 = vmatprep.subr.bf16.mxu0 0
    %547 = vmatpush1.bf16.msra.mxu0 0
    %548 = vmatprep.subr.bf16.mxu0 0
    %549 = vmatpush1.bf16.msra.mxu0 0
    %550 = vmatprep.subr.bf16.mxu0 0
    %551 = vmatpush1.bf16.msra.mxu0 0
    %552 = vmatprep.subr.bf16.mxu0 0
    %553 = vmatpush1.bf16.msra.mxu0 0
    %554 = vmatprep.subr.bf16.mxu0 0
    %555 = vmatpush1.bf16.msra.mxu0 0
    %556 = vmatprep.subr.bf16.mxu0 0
    %557 = vmatpush1.bf16.msra.mxu0 0
    %558 = vmatprep.mubr.bf16.mxu0 0
    %559 = vmatmul.mubr.bf16.gmra.mrb[0].mxu0 %v520
    %v560 = vpop.f32.mrb[0].mxu0
    %v561 = vadd.f32 %v483, %v560
    %v562 = vpop.f32.mrb[0].mxu0
    %v563 = vpop.f32.mrb[0].mxu0
    %v564 = vpop.f32.mrb[0].mxu0
    %565 = vdwg.mxu0
    %vm566 = vcmask 74752
    %567 = vst.msk [vmem:[#allocation2] sm:$0x3] %vm566, %v561
    // Predicated region
    $region30: #{net_forward.5} parent=1 // pred_check
      _
    $region31: #{net_forward.5} parent=1 // pred_check_branch
      %569 = sbr.rel (0) target = $region33
    $region32: #{net_forward.5} parent=1 // pred_region
      %s571 = ssub.s32 32, 32
      %572 = vsyncadd [#allocation3], %s571
      %s574 = sshll.u32 [#allocation2], 4
      %s575 = int_to_ptr.vmem [resolvable:$true] %s574
      %577 = dma.vmem_to_hbm [thread:$0]  %s575, 32, %s7, [#allocation3]
    $region33: #{net_forward.5} parent=1 // pred_fallthru
      _
    // Predicated region
    $region34: #{net_forward.5} parent=1 // pred_check
      _
    $region35: #{net_forward.5} parent=1 // pred_check_branch
      %579 = sbr.rel (0) target = $region37
    $region36: #{net_forward.5} parent=1 // pred_region
      %580 = dma.done [#allocation3], 32
    $region37: #{net_forward.5} parent=1 // pred_fallthru
      _
    %581 = vsyncpa [#allocation3], 1

</llo_original>
